<compile_context>
chip_gen: v6e
topology: v6e:2x2x1
jax: 0.10.0
libtpu: 0.0.40
codegen_flags: <defaults>
</compile_context>

<pallas_src>
import functools
import numpy as np
import jax
import jax.numpy as jnp
from jax.experimental import pallas as pl
from jax.experimental.pallas import tpu as pltpu


# TODO(synk): buteo's create_kernel source is not provided; this is a
# deterministic reimplementation (method=3 gaussian distance weighting,
# circular edge falloff, optional center hole, unnormalised).
def create_kernel(radius=1.0, circular=True, distance_weighted=True,
                  hole=False, sigma=2.0):
    size = int(np.ceil(radius)) * 2 + 1
    c = size // 2
    k = np.zeros((size, size), dtype=np.float64)
    for i in range(size):
        for j in range(size):
            d = np.sqrt((i - c) ** 2 + (j - c) ** 2)
            w = np.exp(-(d ** 2) / (2.0 * sigma ** 2)) if distance_weighted else 1.0
            if circular and d > radius:
                w *= max(0.0, 1.0 - (d - radius))
            k[i, j] = w
    if hole:
        k[c, c] = 0.0
    return k


def _soft_loss_kernel(logits_ref, tpad_ref, ce_ref, *, kernel_weights, classes,
                      weight_const, w_sum, eps, method, TH, W, p):
    k = len(kernel_weights)
    row0 = pl.multiple_of(pl.program_id(1) * TH, TH)

    logits = logits_ref[0].astype(jnp.float32)                 # (C, TH, W)
    m = jnp.max(logits, axis=0, keepdims=True)                 # (1, TH, W)
    z = logits - m                                             # (C, TH, W)
    lse = jnp.log(jnp.sum(jnp.exp(z), axis=0))                 # (TH, W)

    # Single-channel replicate-padded target rows covering this tile (+ halo).
    tslab = tpad_ref[0, 0, pl.ds(row0, TH + 2 * p), :]         # (TH+2p, W+2p)
    t_ctr = tslab[p:p + TH, p:p + W]                           # interior target

    def z_at_class(tmap):
        # z gathered at the class of tmap, via C constant compares (VPU only).
        acc = jnp.zeros((TH, W), jnp.float32)
        for ci, cv in enumerate(classes):
            acc = acc + jnp.where(tmap == jnp.float32(cv), z[ci], 0.0)
        return acc

    num = jnp.zeros((TH, W), jnp.float32)
    cmatch = jnp.zeros((TH, W), jnp.float32)
    for dy in range(k):
        for dx in range(k):
            w = kernel_weights[dy][dx]
            if w == 0.0:
                continue
            tsh = tslab[dy:dy + TH, dx:dx + W]                 # (TH, W)
            num = num + jnp.float32(w) * z_at_class(tsh)
            if method == 'half':
                cmatch = cmatch + jnp.float32(w) * (tsh == t_ctr).astype(jnp.float32)

    if method == 'half':
        # Center-pixel override conv[target class] := weight_const. With
        # disjoint one-hot channels: denom = w_sum - cmatch + weight_const and
        # num gains (weight_const - cmatch) * z[target class].
        z_tc = z_at_class(t_ctr)
        num = num + (jnp.float32(weight_const) - cmatch) * z_tc
        denom = jnp.maximum(
            jnp.float32(w_sum) - cmatch + jnp.float32(weight_const),
            jnp.float32(eps))
        ce = lse - num / denom
    else:
        # method in ('kernel_half', None): denominator is the constant kernel
        # sum (replicate padding -> exactly one active class per neighbor).
        ce = lse - num * jnp.float32(1.0 / max(w_sum, eps))
    # TODO(synk): method='max' (argmax-based center override) not implemented.

    ce_ref[0, 0] = jnp.sum(ce, keepdims=True)                  # per-tile partial sum


def _choose_tile_rows(H, C, W, Hp, Wp, logit_itemsize, budget_bytes):
    """Largest row tile TH (divisor of H, multiple of 8 unless TH == H) that
    keeps the estimated per-step VMEM footprint inside the budget."""
    def est(th):
        logits_io = 2 * C * th * W * logit_itemsize     # double-buffered input tile
        target_io = 2 * Hp * Wp * 4                     # double-buffered padded target
        live = (2 * C + 14) * th * W * 4                # z + exp + ~a dozen (TH,W) maps
        return logits_io + target_io + live
    cands = sorted({t for t in range(8, H + 1, 8) if H % t == 0} | {H})
    fitting = [t for t in cands if est(t) <= budget_bytes]
    return max(fitting) if fitting else min(cands)


def soft_spatial_segmentation_loss(output, target, classes, *, method='half',
                                   kernel_radius=1.0, kernel_circular=True,
                                   kernel_sigma=2.0, epsilon=1e-7,
                                   vmem_tile_budget_bytes=24 * 1024 * 1024):
    B, C, H, W = output.shape
    assert target.shape == (B, 1, H, W)
    assert C == len(classes)

    kernel_np = create_kernel(radius=kernel_radius, circular=kernel_circular,
                              distance_weighted=True,
                              hole=False if method in (None, 'max') else True,
                              sigma=kernel_sigma)
    kernel_size = kernel_np.size
    strength = kernel_size / (kernel_size - 1.0)
    if method == 'kernel_half':
        kernel_np[kernel_np.shape[0] // 2, kernel_np.shape[1] // 2] = \
            kernel_np.sum() * strength
    p = (kernel_np.shape[0] - 1) // 2
    weight_const = float(kernel_np.sum() * strength)
    w_sum = float(kernel_np.sum())

    tpad = jnp.pad(target.astype(jnp.float32),
                   ((0, 0), (0, 0), (p, p), (p, p)), mode='edge')
    Hp, Wp = H + 2 * p, W + 2 * p

    TH = _choose_tile_rows(H, C, W, Hp, Wp, np.dtype(output.dtype).itemsize,
                           vmem_tile_budget_bytes)
    GH = H // TH

    kern = functools.partial(
        _soft_loss_kernel,
        kernel_weights=tuple(tuple(float(x) for x in row) for row in kernel_np),
        classes=tuple(float(c) for c in classes),
        weight_const=weight_const, w_sum=w_sum, eps=float(epsilon),
        method=method, TH=TH, W=W, p=p)

    ce_part = pl.pallas_call(
        kern,
        out_shape=jax.ShapeDtypeStruct((B, GH, 1, 1), jnp.float32),
        grid_spec=pltpu.PrefetchScalarGridSpec(
            num_scalar_prefetch=0,
            grid=(B, GH),
            in_specs=[
                # Logits tile in native dtype (no wrapper f32 pre-cast).
                pl.BlockSpec((1, C, TH, W), lambda b, h: (b, 0, h, 0)),
                # Whole single-channel padded target for batch b; block index
                # is h-invariant, so it is DMA'd once per image, not per tile.
                pl.BlockSpec((1, 1, Hp, Wp), lambda b, h: (b, 0, 0, 0)),
            ],
            out_specs=pl.BlockSpec((1, 1, 1, 1), lambda b, h: (b, h, 0, 0)),
        ),
        compiler_params=pltpu.CompilerParams(
            dimension_semantics=("parallel", "parallel"),
            vmem_limit_bytes=64 * 1024 * 1024),
    )(output, tpad)

    # mean reduction over (B, H, W), matching CrossEntropyLoss(reduction='mean')
    return jnp.sum(ce_part) / jnp.float32(B * H * W)


def reference_loss(output, target, classes, *, method='half',
                   kernel_radius=1.0, kernel_circular=True,
                   kernel_sigma=2.0, epsilon=1e-7):
    """Plain-JAX reference with the module's literal semantics, for validation."""
    B, C, H, W = output.shape
    kernel_np = create_kernel(radius=kernel_radius, circular=kernel_circular,
                              distance_weighted=True,
                              hole=False if method in (None, 'max') else True,
                              sigma=kernel_sigma)
    strength = kernel_np.size / (kernel_np.size - 1.0)
    if method == 'kernel_half':
        kernel_np[kernel_np.shape[0] // 2, kernel_np.shape[1] // 2] = \
            kernel_np.sum() * strength
    p = (kernel_np.shape[0] - 1) // 2
    weight_const = kernel_np.sum() * strength

    cls = jnp.asarray(classes, jnp.float32).reshape(1, -1, 1, 1)
    hot = (target.astype(jnp.float32) == cls).astype(jnp.float32)
    hot_pad = jnp.pad(hot, ((0, 0), (0, 0), (p, p), (p, p)), mode='edge')
    conv = jnp.zeros((B, C, H, W), jnp.float32)
    k = kernel_np.shape[0]
    for dy in range(k):
        for dx in range(k):
            conv = conv + float(kernel_np[dy, dx]) * \
                hot_pad[:, :, dy:dy + H, dx:dx + W]
    if method == 'half':
        conv = jnp.where(hot == 1.0, jnp.float32(weight_const), conv)
    denom = jnp.maximum(jnp.sum(conv, axis=1, keepdims=True),
                        jnp.float32(epsilon))
    tsoft = conv / denom
    logp = jax.nn.log_softmax(output.astype(jnp.float32), axis=1)
    return jnp.mean(-jnp.sum(tsoft * logp, axis=1))


if __name__ == "__main__":
    key = jax.random.PRNGKey(0)
    k1, k2 = jax.random.split(key)

    B, H, W = 2, 16, 16
    classes = [10, 20, 30, 40]
    C = len(classes)

    output = jax.random.normal(k1, (B, C, H, W), jnp.float32)   # logits
    idx = jax.random.randint(k2, (B, 1, H, W), 0, C)
    target = jnp.asarray(classes, jnp.float32)[idx]             # class values

    for method in ('half', None, 'kernel_half'):
        loss = soft_spatial_segmentation_loss(output, target, classes,
                                              method=method)
        loss = jax.block_until_ready(loss)
        ref = reference_loss(output, target, classes, method=method)
        assert np.allclose(np.asarray(loss), np.asarray(ref),
                           rtol=1e-5, atol=1e-5), \
            (method, float(loss), float(ref))

    print("KERNEL_OK")
</pallas_src>

<mosaic_0001>
module attributes {stable_mosaic.version = 11 : i64} {
  func.func @_soft_loss_kernel(%arg0: i32, %arg1: i32, %arg2: memref<1x4x16x16xf32, #tpu.memory_space<vmem>>, %arg3: memref<1x1x18x18xf32, #tpu.memory_space<vmem>>, %arg4: memref<1x1x1x1xf32, #tpu.memory_space<vmem>>) attributes {dimension_semantics = [#tpu.dimension_semantics<parallel>, #tpu.dimension_semantics<parallel>], iteration_bounds = array<i64: 2, 1>, scalar_prefetch = 0 : i64, scratch_operands = 0 : i64, tpu.core_type = #tpu.core_type<tc>, window_params = [{transform_indices = @transform_0, window_bounds = array<i64: 1, 4, 16, 16>}, {transform_indices = @transform_1, window_bounds = array<i64: 1, 1, 18, 18>}, {transform_indices = @transform_2, window_bounds = array<i64: 1, 1, 1, 1>}]} {
    %c16_i32 = arith.constant 16 : i32
    %0 = arith.muli %arg1, %c16_i32 : i32
    %1 = tpu.assume_multiple %0, 16 : i32
    %c0 = arith.constant 0 : index
    %c0_0 = arith.constant 0 : index
    %c0_1 = arith.constant 0 : index
    %c0_2 = arith.constant 0 : index
    %2 = vector.load %arg2[%c0, %c0_0, %c0_1, %c0_2] : memref<1x4x16x16xf32, #tpu.memory_space<vmem>>, vector<1x4x16x16xf32>
    %3 = vector.shape_cast %2 : vector<1x4x16x16xf32> to vector<4x16x16xf32>
    %cst = arith.constant dense<0xFF800000> : vector<16x16xf32>
    %4 = vector.multi_reduction <maximumf>, %3, %cst [0] : vector<4x16x16xf32> to vector<16x16xf32>
    %5 = vector.shape_cast %4 : vector<16x16xf32> to vector<1x16x16xf32>
    %6 = vector.broadcast %5 : vector<1x16x16xf32> to vector<4x16x16xf32>
    %7 = arith.subf %3, %6 : vector<4x16x16xf32>
    %8 = math.exp %7 : vector<4x16x16xf32>
    %cst_3 = arith.constant dense<0.000000e+00> : vector<16x16xf32>
    %9 = vector.multi_reduction <add>, %8, %cst_3 [0] : vector<4x16x16xf32> to vector<16x16xf32>
    %10 = math.log %9 : vector<16x16xf32>
    %c0_4 = arith.constant 0 : index
    %c0_5 = arith.constant 0 : index
    %11 = arith.index_cast %1 : i32 to index
    %c0_6 = arith.constant 0 : index
    %12 = vector.load %arg3[%c0_4, %c0_5, %11, %c0_6] : memref<1x1x18x18xf32, #tpu.memory_space<vmem>>, vector<1x1x18x18xf32>
    %13 = vector.shape_cast %12 : vector<1x1x18x18xf32> to vector<18x18xf32>
    %14 = vector.extract_strided_slice %13 {offsets = [1, 1], sizes = [16, 16], strides = [1, 1]} : vector<18x18xf32> to vector<16x16xf32>
    %cst_7 = arith.constant 0.000000e+00 : f32
    %15 = vector.broadcast %cst_7 : f32 to vector<16x16xf32>
    %cst_8 = arith.constant 0.000000e+00 : f32
    %16 = vector.broadcast %cst_8 : f32 to vector<16x16xf32>
    %17 = vector.extract_strided_slice %13 {offsets = [0, 0], sizes = [16, 16], strides = [1, 1]} : vector<18x18xf32> to vector<16x16xf32>
    %cst_9 = arith.constant 0.000000e+00 : f32
    %18 = vector.broadcast %cst_9 : f32 to vector<16x16xf32>
    %cst_10 = arith.constant 1.000000e+01 : f32
    %19 = vector.broadcast %cst_10 : f32 to vector<16x16xf32>
    %20 = arith.cmpf oeq, %17, %19 : vector<16x16xf32>
    %21 = vector.extract_strided_slice %7 {offsets = [0, 0, 0], sizes = [1, 16, 16], strides = [1, 1, 1]} : vector<4x16x16xf32> to vector<1x16x16xf32>
    %22 = vector.shape_cast %21 : vector<1x16x16xf32> to vector<16x16xf32>
    %cst_11 = arith.constant 0.000000e+00 : f32
    %23 = vector.broadcast %cst_11 : f32 to vector<16x16xf32>
    %24 = arith.select %20, %22, %23 : vector<16x16xi1>, vector<16x16xf32>
    %25 = arith.addf %18, %24 : vector<16x16xf32>
    %cst_12 = arith.constant 2.000000e+01 : f32
    %26 = vector.broadcast %cst_12 : f32 to vector<16x16xf32>
    %27 = arith.cmpf oeq, %17, %26 : vector<16x16xf32>
    %28 = vector.extract_strided_slice %7 {offsets = [1, 0, 0], sizes = [1, 16, 16], strides = [1, 1, 1]} : vector<4x16x16xf32> to vector<1x16x16xf32>
    %29 = vector.shape_cast %28 : vector<1x16x16xf32> to vector<16x16xf32>
    %cst_13 = arith.constant 0.000000e+00 : f32
    %30 = vector.broadcast %cst_13 : f32 to vector<16x16xf32>
    %31 = arith.select %27, %29, %30 : vector<16x16xi1>, vector<16x16xf32>
    %32 = arith.addf %25, %31 : vector<16x16xf32>
    %cst_14 = arith.constant 3.000000e+01 : f32
    %33 = vector.broadcast %cst_14 : f32 to vector<16x16xf32>
    %34 = arith.cmpf oeq, %17, %33 : vector<16x16xf32>
    %35 = vector.extract_strided_slice %7 {offsets = [2, 0, 0], sizes = [1, 16, 16], strides = [1, 1, 1]} : vector<4x16x16xf32> to vector<1x16x16xf32>
    %36 = vector.shape_cast %35 : vector<1x16x16xf32> to vector<16x16xf32>
    %cst_15 = arith.constant 0.000000e+00 : f32
    %37 = vector.broadcast %cst_15 : f32 to vector<16x16xf32>
    %38 = arith.select %34, %36, %37 : vector<16x16xi1>, vector<16x16xf32>
    %39 = arith.addf %32, %38 : vector<16x16xf32>
    %cst_16 = arith.constant 4.000000e+01 : f32
    %40 = vector.broadcast %cst_16 : f32 to vector<16x16xf32>
    %41 = arith.cmpf oeq, %17, %40 : vector<16x16xf32>
    %42 = vector.extract_strided_slice %7 {offsets = [3, 0, 0], sizes = [1, 16, 16], strides = [1, 1, 1]} : vector<4x16x16xf32> to vector<1x16x16xf32>
    %43 = vector.shape_cast %42 : vector<1x16x16xf32> to vector<16x16xf32>
    %cst_17 = arith.constant 0.000000e+00 : f32
    %44 = vector.broadcast %cst_17 : f32 to vector<16x16xf32>
    %45 = arith.select %41, %43, %44 : vector<16x16xi1>, vector<16x16xf32>
    %46 = arith.addf %39, %45 : vector<16x16xf32>
    %cst_18 = arith.constant 0.456210941 : f32
    %47 = vector.broadcast %cst_18 : f32 to vector<16x16xf32>
    %48 = arith.mulf %47, %46 : vector<16x16xf32>
    %49 = arith.addf %15, %48 : vector<16x16xf32>
    %50 = arith.cmpf oeq, %17, %14 : vector<16x16xf32>
    %51 = arith.extui %50 : vector<16x16xi1> to vector<16x16xi32>
    %52 = arith.sitofp %51 : vector<16x16xi32> to vector<16x16xf32>
    %cst_19 = arith.constant 0.456210941 : f32
    %53 = vector.broadcast %cst_19 : f32 to vector<16x16xf32>
    %54 = arith.mulf %53, %52 : vector<16x16xf32>
    %55 = arith.addf %16, %54 : vector<16x16xf32>
    %56 = vector.extract_strided_slice %13 {offsets = [0, 1], sizes = [16, 16], strides = [1, 1]} : vector<18x18xf32> to vector<16x16xf32>
    %cst_20 = arith.constant 0.000000e+00 : f32
    %57 = vector.broadcast %cst_20 : f32 to vector<16x16xf32>
    %cst_21 = arith.constant 1.000000e+01 : f32
    %58 = vector.broadcast %cst_21 : f32 to vector<16x16xf32>
    %59 = arith.cmpf oeq, %56, %58 : vector<16x16xf32>
    %60 = vector.extract_strided_slice %7 {offsets = [0, 0, 0], sizes = [1, 16, 16], strides = [1, 1, 1]} : vector<4x16x16xf32> to vector<1x16x16xf32>
    %61 = vector.shape_cast %60 : vector<1x16x16xf32> to vector<16x16xf32>
    %cst_22 = arith.constant 0.000000e+00 : f32
    %62 = vector.broadcast %cst_22 : f32 to vector<16x16xf32>
    %63 = arith.select %59, %61, %62 : vector<16x16xi1>, vector<16x16xf32>
    %64 = arith.addf %57, %63 : vector<16x16xf32>
    %cst_23 = arith.constant 2.000000e+01 : f32
    %65 = vector.broadcast %cst_23 : f32 to vector<16x16xf32>
    %66 = arith.cmpf oeq, %56, %65 : vector<16x16xf32>
    %67 = vector.extract_strided_slice %7 {offsets = [1, 0, 0], sizes = [1, 16, 16], strides = [1, 1, 1]} : vector<4x16x16xf32> to vector<1x16x16xf32>
    %68 = vector.shape_cast %67 : vector<1x16x16xf32> to vector<16x16xf32>
    %cst_24 = arith.constant 0.000000e+00 : f32
    %69 = vector.broadcast %cst_24 : f32 to vector<16x16xf32>
    %70 = arith.select %66, %68, %69 : vector<16x16xi1>, vector<16x16xf32>
    %71 = arith.addf %64, %70 : vector<16x16xf32>
    %cst_25 = arith.constant 3.000000e+01 : f32
    %72 = vector.broadcast %cst_25 : f32 to vector<16x16xf32>
    %73 = arith.cmpf oeq, %56, %72 : vector<16x16xf32>
    %74 = vector.extract_strided_slice %7 {offsets = [2, 0, 0], sizes = [1, 16, 16], strides = [1, 1, 1]} : vector<4x16x16xf32> to vector<1x16x16xf32>
    %75 = vector.shape_cast %74 : vector<1x16x16xf32> to vector<16x16xf32>
    %cst_26 = arith.constant 0.000000e+00 : f32
    %76 = vector.broadcast %cst_26 : f32 to vector<16x16xf32>
    %77 = arith.select %73, %75, %76 : vector<16x16xi1>, vector<16x16xf32>
    %78 = arith.addf %71, %77 : vector<16x16xf32>
    %cst_27 = arith.constant 4.000000e+01 : f32
    %79 = vector.broadcast %cst_27 : f32 to vector<16x16xf32>
    %80 = arith.cmpf oeq, %56, %79 : vector<16x16xf32>
    %81 = vector.extract_strided_slice %7 {offsets = [3, 0, 0], sizes = [1, 16, 16], strides = [1, 1, 1]} : vector<4x16x16xf32> to vector<1x16x16xf32>
    %82 = vector.shape_cast %81 : vector<1x16x16xf32> to vector<16x16xf32>
    %cst_28 = arith.constant 0.000000e+00 : f32
    %83 = vector.broadcast %cst_28 : f32 to vector<16x16xf32>
    %84 = arith.select %80, %82, %83 : vector<16x16xi1>, vector<16x16xf32>
    %85 = arith.addf %78, %84 : vector<16x16xf32>
    %cst_29 = arith.constant 0.882496893 : f32
    %86 = vector.broadcast %cst_29 : f32 to vector<16x16xf32>
    %87 = arith.mulf %86, %85 : vector<16x16xf32>
    %88 = arith.addf %49, %87 : vector<16x16xf32>
    %89 = arith.cmpf oeq, %56, %14 : vector<16x16xf32>
    %90 = arith.extui %89 : vector<16x16xi1> to vector<16x16xi32>
    %91 = arith.sitofp %90 : vector<16x16xi32> to vector<16x16xf32>
    %cst_30 = arith.constant 0.882496893 : f32
    %92 = vector.broadcast %cst_30 : f32 to vector<16x16xf32>
    %93 = arith.mulf %92, %91 : vector<16x16xf32>
    %94 = arith.addf %55, %93 : vector<16x16xf32>
    %95 = vector.extract_strided_slice %13 {offsets = [0, 2], sizes = [16, 16], strides = [1, 1]} : vector<18x18xf32> to vector<16x16xf32>
    %cst_31 = arith.constant 0.000000e+00 : f32
    %96 = vector.broadcast %cst_31 : f32 to vector<16x16xf32>
    %cst_32 = arith.constant 1.000000e+01 : f32
    %97 = vector.broadcast %cst_32 : f32 to vector<16x16xf32>
    %98 = arith.cmpf oeq, %95, %97 : vector<16x16xf32>
    %99 = vector.extract_strided_slice %7 {offsets = [0, 0, 0], sizes = [1, 16, 16], strides = [1, 1, 1]} : vector<4x16x16xf32> to vector<1x16x16xf32>
    %100 = vector.shape_cast %99 : vector<1x16x16xf32> to vector<16x16xf32>
    %cst_33 = arith.constant 0.000000e+00 : f32
    %101 = vector.broadcast %cst_33 : f32 to vector<16x16xf32>
    %102 = arith.select %98, %100, %101 : vector<16x16xi1>, vector<16x16xf32>
    %103 = arith.addf %96, %102 : vector<16x16xf32>
    %cst_34 = arith.constant 2.000000e+01 : f32
    %104 = vector.broadcast %cst_34 : f32 to vector<16x16xf32>
    %105 = arith.cmpf oeq, %95, %104 : vector<16x16xf32>
    %106 = vector.extract_strided_slice %7 {offsets = [1, 0, 0], sizes = [1, 16, 16], strides = [1, 1, 1]} : vector<4x16x16xf32> to vector<1x16x16xf32>
    %107 = vector.shape_cast %106 : vector<1x16x16xf32> to vector<16x16xf32>
    %cst_35 = arith.constant 0.000000e+00 : f32
    %108 = vector.broadcast %cst_35 : f32 to vector<16x16xf32>
    %109 = arith.select %105, %107, %108 : vector<16x16xi1>, vector<16x16xf32>
    %110 = arith.addf %103, %109 : vector<16x16xf32>
    %cst_36 = arith.constant 3.000000e+01 : f32
    %111 = vector.broadcast %cst_36 : f32 to vector<16x16xf32>
    %112 = arith.cmpf oeq, %95, %111 : vector<16x16xf32>
    %113 = vector.extract_strided_slice %7 {offsets = [2, 0, 0], sizes = [1, 16, 16], strides = [1, 1, 1]} : vector<4x16x16xf32> to vector<1x16x16xf32>
    %114 = vector.shape_cast %113 : vector<1x16x16xf32> to vector<16x16xf32>
    %cst_37 = arith.constant 0.000000e+00 : f32
    %115 = vector.broadcast %cst_37 : f32 to vector<16x16xf32>
    %116 = arith.select %112, %114, %115 : vector<16x16xi1>, vector<16x16xf32>
    %117 = arith.addf %110, %116 : vector<16x16xf32>
    %cst_38 = arith.constant 4.000000e+01 : f32
    %118 = vector.broadcast %cst_38 : f32 to vector<16x16xf32>
    %119 = arith.cmpf oeq, %95, %118 : vector<16x16xf32>
    %120 = vector.extract_strided_slice %7 {offsets = [3, 0, 0], sizes = [1, 16, 16], strides = [1, 1, 1]} : vector<4x16x16xf32> to vector<1x16x16xf32>
    %121 = vector.shape_cast %120 : vector<1x16x16xf32> to vector<16x16xf32>
    %cst_39 = arith.constant 0.000000e+00 : f32
    %122 = vector.broadcast %cst_39 : f32 to vector<16x16xf32>
    %123 = arith.select %119, %121, %122 : vector<16x16xi1>, vector<16x16xf32>
    %124 = arith.addf %117, %123 : vector<16x16xf32>
    %cst_40 = arith.constant 0.456210941 : f32
    %125 = vector.broadcast %cst_40 : f32 to vector<16x16xf32>
    %126 = arith.mulf %125, %124 : vector<16x16xf32>
    %127 = arith.addf %88, %126 : vector<16x16xf32>
    %128 = arith.cmpf oeq, %95, %14 : vector<16x16xf32>
    %129 = arith.extui %128 : vector<16x16xi1> to vector<16x16xi32>
    %130 = arith.sitofp %129 : vector<16x16xi32> to vector<16x16xf32>
    %cst_41 = arith.constant 0.456210941 : f32
    %131 = vector.broadcast %cst_41 : f32 to vector<16x16xf32>
    %132 = arith.mulf %131, %130 : vector<16x16xf32>
    %133 = arith.addf %94, %132 : vector<16x16xf32>
    %134 = vector.extract_strided_slice %13 {offsets = [1, 0], sizes = [16, 16], strides = [1, 1]} : vector<18x18xf32> to vector<16x16xf32>
    %cst_42 = arith.constant 0.000000e+00 : f32
    %135 = vector.broadcast %cst_42 : f32 to vector<16x16xf32>
    %cst_43 = arith.constant 1.000000e+01 : f32
    %136 = vector.broadcast %cst_43 : f32 to vector<16x16xf32>
    %137 = arith.cmpf oeq, %134, %136 : vector<16x16xf32>
    %138 = vector.extract_strided_slice %7 {offsets = [0, 0, 0], sizes = [1, 16, 16], strides = [1, 1, 1]} : vector<4x16x16xf32> to vector<1x16x16xf32>
    %139 = vector.shape_cast %138 : vector<1x16x16xf32> to vector<16x16xf32>
    %cst_44 = arith.constant 0.000000e+00 : f32
    %140 = vector.broadcast %cst_44 : f32 to vector<16x16xf32>
    %141 = arith.select %137, %139, %140 : vector<16x16xi1>, vector<16x16xf32>
    %142 = arith.addf %135, %141 : vector<16x16xf32>
    %cst_45 = arith.constant 2.000000e+01 : f32
    %143 = vector.broadcast %cst_45 : f32 to vector<16x16xf32>
    %144 = arith.cmpf oeq, %134, %143 : vector<16x16xf32>
    %145 = vector.extract_strided_slice %7 {offsets = [1, 0, 0], sizes = [1, 16, 16], strides = [1, 1, 1]} : vector<4x16x16xf32> to vector<1x16x16xf32>
    %146 = vector.shape_cast %145 : vector<1x16x16xf32> to vector<16x16xf32>
    %cst_46 = arith.constant 0.000000e+00 : f32
    %147 = vector.broadcast %cst_46 : f32 to vector<16x16xf32>
    %148 = arith.select %144, %146, %147 : vector<16x16xi1>, vector<16x16xf32>
    %149 = arith.addf %142, %148 : vector<16x16xf32>
    %cst_47 = arith.constant 3.000000e+01 : f32
    %150 = vector.broadcast %cst_47 : f32 to vector<16x16xf32>
    %151 = arith.cmpf oeq, %134, %150 : vector<16x16xf32>
    %152 = vector.extract_strided_slice %7 {offsets = [2, 0, 0], sizes = [1, 16, 16], strides = [1, 1, 1]} : vector<4x16x16xf32> to vector<1x16x16xf32>
    %153 = vector.shape_cast %152 : vector<1x16x16xf32> to vector<16x16xf32>
    %cst_48 = arith.constant 0.000000e+00 : f32
    %154 = vector.broadcast %cst_48 : f32 to vector<16x16xf32>
    %155 = arith.select %151, %153, %154 : vector<16x16xi1>, vector<16x16xf32>
    %156 = arith.addf %149, %155 : vector<16x16xf32>
    %cst_49 = arith.constant 4.000000e+01 : f32
    %157 = vector.broadcast %cst_49 : f32 to vector<16x16xf32>
    %158 = arith.cmpf oeq, %134, %157 : vector<16x16xf32>
    %159 = vector.extract_strided_slice %7 {offsets = [3, 0, 0], sizes = [1, 16, 16], strides = [1, 1, 1]} : vector<4x16x16xf32> to vector<1x16x16xf32>
    %160 = vector.shape_cast %159 : vector<1x16x16xf32> to vector<16x16xf32>
    %cst_50 = arith.constant 0.000000e+00 : f32
    %161 = vector.broadcast %cst_50 : f32 to vector<16x16xf32>
    %162 = arith.select %158, %160, %161 : vector<16x16xi1>, vector<16x16xf32>
    %163 = arith.addf %156, %162 : vector<16x16xf32>
    %cst_51 = arith.constant 0.882496893 : f32
    %164 = vector.broadcast %cst_51 : f32 to vector<16x16xf32>
    %165 = arith.mulf %164, %163 : vector<16x16xf32>
    %166 = arith.addf %127, %165 : vector<16x16xf32>
    %167 = arith.cmpf oeq, %134, %14 : vector<16x16xf32>
    %168 = arith.extui %167 : vector<16x16xi1> to vector<16x16xi32>
    %169 = arith.sitofp %168 : vector<16x16xi32> to vector<16x16xf32>
    %cst_52 = arith.constant 0.882496893 : f32
    %170 = vector.broadcast %cst_52 : f32 to vector<16x16xf32>
    %171 = arith.mulf %170, %169 : vector<16x16xf32>
    %172 = arith.addf %133, %171 : vector<16x16xf32>
    %173 = vector.extract_strided_slice %13 {offsets = [1, 2], sizes = [16, 16], strides = [1, 1]} : vector<18x18xf32> to vector<16x16xf32>
    %cst_53 = arith.constant 0.000000e+00 : f32
    %174 = vector.broadcast %cst_53 : f32 to vector<16x16xf32>
    %cst_54 = arith.constant 1.000000e+01 : f32
    %175 = vector.broadcast %cst_54 : f32 to vector<16x16xf32>
    %176 = arith.cmpf oeq, %173, %175 : vector<16x16xf32>
    %177 = vector.extract_strided_slice %7 {offsets = [0, 0, 0], sizes = [1, 16, 16], strides = [1, 1, 1]} : vector<4x16x16xf32> to vector<1x16x16xf32>
    %178 = vector.shape_cast %177 : vector<1x16x16xf32> to vector<16x16xf32>
    %cst_55 = arith.constant 0.000000e+00 : f32
    %179 = vector.broadcast %cst_55 : f32 to vector<16x16xf32>
    %180 = arith.select %176, %178, %179 : vector<16x16xi1>, vector<16x16xf32>
    %181 = arith.addf %174, %180 : vector<16x16xf32>
    %cst_56 = arith.constant 2.000000e+01 : f32
    %182 = vector.broadcast %cst_56 : f32 to vector<16x16xf32>
    %183 = arith.cmpf oeq, %173, %182 : vector<16x16xf32>
    %184 = vector.extract_strided_slice %7 {offsets = [1, 0, 0], sizes = [1, 16, 16], strides = [1, 1, 1]} : vector<4x16x16xf32> to vector<1x16x16xf32>
    %185 = vector.shape_cast %184 : vector<1x16x16xf32> to vector<16x16xf32>
    %cst_57 = arith.constant 0.000000e+00 : f32
    %186 = vector.broadcast %cst_57 : f32 to vector<16x16xf32>
    %187 = arith.select %183, %185, %186 : vector<16x16xi1>, vector<16x16xf32>
    %188 = arith.addf %181, %187 : vector<16x16xf32>
    %cst_58 = arith.constant 3.000000e+01 : f32
    %189 = vector.broadcast %cst_58 : f32 to vector<16x16xf32>
    %190 = arith.cmpf oeq, %173, %189 : vector<16x16xf32>
    %191 = vector.extract_strided_slice %7 {offsets = [2, 0, 0], sizes = [1, 16, 16], strides = [1, 1, 1]} : vector<4x16x16xf32> to vector<1x16x16xf32>
    %192 = vector.shape_cast %191 : vector<1x16x16xf32> to vector<16x16xf32>
    %cst_59 = arith.constant 0.000000e+00 : f32
    %193 = vector.broadcast %cst_59 : f32 to vector<16x16xf32>
    %194 = arith.select %190, %192, %193 : vector<16x16xi1>, vector<16x16xf32>
    %195 = arith.addf %188, %194 : vector<16x16xf32>
    %cst_60 = arith.constant 4.000000e+01 : f32
    %196 = vector.broadcast %cst_60 : f32 to vector<16x16xf32>
    %197 = arith.cmpf oeq, %173, %196 : vector<16x16xf32>
    %198 = vector.extract_strided_slice %7 {offsets = [3, 0, 0], sizes = [1, 16, 16], strides = [1, 1, 1]} : vector<4x16x16xf32> to vector<1x16x16xf32>
    %199 = vector.shape_cast %198 : vector<1x16x16xf32> to vector<16x16xf32>
    %cst_61 = arith.constant 0.000000e+00 : f32
    %200 = vector.broadcast %cst_61 : f32 to vector<16x16xf32>
    %201 = arith.select %197, %199, %200 : vector<16x16xi1>, vector<16x16xf32>
    %202 = arith.addf %195, %201 : vector<16x16xf32>
    %cst_62 = arith.constant 0.882496893 : f32
    %203 = vector.broadcast %cst_62 : f32 to vector<16x16xf32>
    %204 = arith.mulf %203, %202 : vector<16x16xf32>
    %205 = arith.addf %166, %204 : vector<16x16xf32>
    %206 = arith.cmpf oeq, %173, %14 : vector<16x16xf32>
    %207 = arith.extui %206 : vector<16x16xi1> to vector<16x16xi32>
    %208 = arith.sitofp %207 : vector<16x16xi32> to vector<16x16xf32>
    %cst_63 = arith.constant 0.882496893 : f32
    %209 = vector.broadcast %cst_63 : f32 to vector<16x16xf32>
    %210 = arith.mulf %209, %208 : vector<16x16xf32>
    %211 = arith.addf %172, %210 : vector<16x16xf32>
    %212 = vector.extract_strided_slice %13 {offsets = [2, 0], sizes = [16, 16], strides = [1, 1]} : vector<18x18xf32> to vector<16x16xf32>
    %cst_64 = arith.constant 0.000000e+00 : f32
    %213 = vector.broadcast %cst_64 : f32 to vector<16x16xf32>
    %cst_65 = arith.constant 1.000000e+01 : f32
    %214 = vector.broadcast %cst_65 : f32 to vector<16x16xf32>
    %215 = arith.cmpf oeq, %212, %214 : vector<16x16xf32>
    %216 = vector.extract_strided_slice %7 {offsets = [0, 0, 0], sizes = [1, 16, 16], strides = [1, 1, 1]} : vector<4x16x16xf32> to vector<1x16x16xf32>
    %217 = vector.shape_cast %216 : vector<1x16x16xf32> to vector<16x16xf32>
    %cst_66 = arith.constant 0.000000e+00 : f32
    %218 = vector.broadcast %cst_66 : f32 to vector<16x16xf32>
    %219 = arith.select %215, %217, %218 : vector<16x16xi1>, vector<16x16xf32>
    %220 = arith.addf %213, %219 : vector<16x16xf32>
    %cst_67 = arith.constant 2.000000e+01 : f32
    %221 = vector.broadcast %cst_67 : f32 to vector<16x16xf32>
    %222 = arith.cmpf oeq, %212, %221 : vector<16x16xf32>
    %223 = vector.extract_strided_slice %7 {offsets = [1, 0, 0], sizes = [1, 16, 16], strides = [1, 1, 1]} : vector<4x16x16xf32> to vector<1x16x16xf32>
    %224 = vector.shape_cast %223 : vector<1x16x16xf32> to vector<16x16xf32>
    %cst_68 = arith.constant 0.000000e+00 : f32
    %225 = vector.broadcast %cst_68 : f32 to vector<16x16xf32>
    %226 = arith.select %222, %224, %225 : vector<16x16xi1>, vector<16x16xf32>
    %227 = arith.addf %220, %226 : vector<16x16xf32>
    %cst_69 = arith.constant 3.000000e+01 : f32
    %228 = vector.broadcast %cst_69 : f32 to vector<16x16xf32>
    %229 = arith.cmpf oeq, %212, %228 : vector<16x16xf32>
    %230 = vector.extract_strided_slice %7 {offsets = [2, 0, 0], sizes = [1, 16, 16], strides = [1, 1, 1]} : vector<4x16x16xf32> to vector<1x16x16xf32>
    %231 = vector.shape_cast %230 : vector<1x16x16xf32> to vector<16x16xf32>
    %cst_70 = arith.constant 0.000000e+00 : f32
    %232 = vector.broadcast %cst_70 : f32 to vector<16x16xf32>
    %233 = arith.select %229, %231, %232 : vector<16x16xi1>, vector<16x16xf32>
    %234 = arith.addf %227, %233 : vector<16x16xf32>
    %cst_71 = arith.constant 4.000000e+01 : f32
    %235 = vector.broadcast %cst_71 : f32 to vector<16x16xf32>
    %236 = arith.cmpf oeq, %212, %235 : vector<16x16xf32>
    %237 = vector.extract_strided_slice %7 {offsets = [3, 0, 0], sizes = [1, 16, 16], strides = [1, 1, 1]} : vector<4x16x16xf32> to vector<1x16x16xf32>
    %238 = vector.shape_cast %237 : vector<1x16x16xf32> to vector<16x16xf32>
    %cst_72 = arith.constant 0.000000e+00 : f32
    %239 = vector.broadcast %cst_72 : f32 to vector<16x16xf32>
    %240 = arith.select %236, %238, %239 : vector<16x16xi1>, vector<16x16xf32>
    %241 = arith.addf %234, %240 : vector<16x16xf32>
    %cst_73 = arith.constant 0.456210941 : f32
    %242 = vector.broadcast %cst_73 : f32 to vector<16x16xf32>
    %243 = arith.mulf %242, %241 : vector<16x16xf32>
    %244 = arith.addf %205, %243 : vector<16x16xf32>
    %245 = arith.cmpf oeq, %212, %14 : vector<16x16xf32>
    %246 = arith.extui %245 : vector<16x16xi1> to vector<16x16xi32>
    %247 = arith.sitofp %246 : vector<16x16xi32> to vector<16x16xf32>
    %cst_74 = arith.constant 0.456210941 : f32
    %248 = vector.broadcast %cst_74 : f32 to vector<16x16xf32>
    %249 = arith.mulf %248, %247 : vector<16x16xf32>
    %250 = arith.addf %211, %249 : vector<16x16xf32>
    %251 = vector.extract_strided_slice %13 {offsets = [2, 1], sizes = [16, 16], strides = [1, 1]} : vector<18x18xf32> to vector<16x16xf32>
    %cst_75 = arith.constant 0.000000e+00 : f32
    %252 = vector.broadcast %cst_75 : f32 to vector<16x16xf32>
    %cst_76 = arith.constant 1.000000e+01 : f32
    %253 = vector.broadcast %cst_76 : f32 to vector<16x16xf32>
    %254 = arith.cmpf oeq, %251, %253 : vector<16x16xf32>
    %255 = vector.extract_strided_slice %7 {offsets = [0, 0, 0], sizes = [1, 16, 16], strides = [1, 1, 1]} : vector<4x16x16xf32> to vector<1x16x16xf32>
    %256 = vector.shape_cast %255 : vector<1x16x16xf32> to vector<16x16xf32>
    %cst_77 = arith.constant 0.000000e+00 : f32
    %257 = vector.broadcast %cst_77 : f32 to vector<16x16xf32>
    %258 = arith.select %254, %256, %257 : vector<16x16xi1>, vector<16x16xf32>
    %259 = arith.addf %252, %258 : vector<16x16xf32>
    %cst_78 = arith.constant 2.000000e+01 : f32
    %260 = vector.broadcast %cst_78 : f32 to vector<16x16xf32>
    %261 = arith.cmpf oeq, %251, %260 : vector<16x16xf32>
    %262 = vector.extract_strided_slice %7 {offsets = [1, 0, 0], sizes = [1, 16, 16], strides = [1, 1, 1]} : vector<4x16x16xf32> to vector<1x16x16xf32>
    %263 = vector.shape_cast %262 : vector<1x16x16xf32> to vector<16x16xf32>
    %cst_79 = arith.constant 0.000000e+00 : f32
    %264 = vector.broadcast %cst_79 : f32 to vector<16x16xf32>
    %265 = arith.select %261, %263, %264 : vector<16x16xi1>, vector<16x16xf32>
    %266 = arith.addf %259, %265 : vector<16x16xf32>
    %cst_80 = arith.constant 3.000000e+01 : f32
    %267 = vector.broadcast %cst_80 : f32 to vector<16x16xf32>
    %268 = arith.cmpf oeq, %251, %267 : vector<16x16xf32>
    %269 = vector.extract_strided_slice %7 {offsets = [2, 0, 0], sizes = [1, 16, 16], strides = [1, 1, 1]} : vector<4x16x16xf32> to vector<1x16x16xf32>
    %270 = vector.shape_cast %269 : vector<1x16x16xf32> to vector<16x16xf32>
    %cst_81 = arith.constant 0.000000e+00 : f32
    %271 = vector.broadcast %cst_81 : f32 to vector<16x16xf32>
    %272 = arith.select %268, %270, %271 : vector<16x16xi1>, vector<16x16xf32>
    %273 = arith.addf %266, %272 : vector<16x16xf32>
    %cst_82 = arith.constant 4.000000e+01 : f32
    %274 = vector.broadcast %cst_82 : f32 to vector<16x16xf32>
    %275 = arith.cmpf oeq, %251, %274 : vector<16x16xf32>
    %276 = vector.extract_strided_slice %7 {offsets = [3, 0, 0], sizes = [1, 16, 16], strides = [1, 1, 1]} : vector<4x16x16xf32> to vector<1x16x16xf32>
    %277 = vector.shape_cast %276 : vector<1x16x16xf32> to vector<16x16xf32>
    %cst_83 = arith.constant 0.000000e+00 : f32
    %278 = vector.broadcast %cst_83 : f32 to vector<16x16xf32>
    %279 = arith.select %275, %277, %278 : vector<16x16xi1>, vector<16x16xf32>
    %280 = arith.addf %273, %279 : vector<16x16xf32>
    %cst_84 = arith.constant 0.882496893 : f32
    %281 = vector.broadcast %cst_84 : f32 to vector<16x16xf32>
    %282 = arith.mulf %281, %280 : vector<16x16xf32>
    %283 = arith.addf %244, %282 : vector<16x16xf32>
    %284 = arith.cmpf oeq, %251, %14 : vector<16x16xf32>
    %285 = arith.extui %284 : vector<16x16xi1> to vector<16x16xi32>
    %286 = arith.sitofp %285 : vector<16x16xi32> to vector<16x16xf32>
    %cst_85 = arith.constant 0.882496893 : f32
    %287 = vector.broadcast %cst_85 : f32 to vector<16x16xf32>
    %288 = arith.mulf %287, %286 : vector<16x16xf32>
    %289 = arith.addf %250, %288 : vector<16x16xf32>
    %290 = vector.extract_strided_slice %13 {offsets = [2, 2], sizes = [16, 16], strides = [1, 1]} : vector<18x18xf32> to vector<16x16xf32>
    %cst_86 = arith.constant 0.000000e+00 : f32
    %291 = vector.broadcast %cst_86 : f32 to vector<16x16xf32>
    %cst_87 = arith.constant 1.000000e+01 : f32
    %292 = vector.broadcast %cst_87 : f32 to vector<16x16xf32>
    %293 = arith.cmpf oeq, %290, %292 : vector<16x16xf32>
    %294 = vector.extract_strided_slice %7 {offsets = [0, 0, 0], sizes = [1, 16, 16], strides = [1, 1, 1]} : vector<4x16x16xf32> to vector<1x16x16xf32>
    %295 = vector.shape_cast %294 : vector<1x16x16xf32> to vector<16x16xf32>
    %cst_88 = arith.constant 0.000000e+00 : f32
    %296 = vector.broadcast %cst_88 : f32 to vector<16x16xf32>
    %297 = arith.select %293, %295, %296 : vector<16x16xi1>, vector<16x16xf32>
    %298 = arith.addf %291, %297 : vector<16x16xf32>
    %cst_89 = arith.constant 2.000000e+01 : f32
    %299 = vector.broadcast %cst_89 : f32 to vector<16x16xf32>
    %300 = arith.cmpf oeq, %290, %299 : vector<16x16xf32>
    %301 = vector.extract_strided_slice %7 {offsets = [1, 0, 0], sizes = [1, 16, 16], strides = [1, 1, 1]} : vector<4x16x16xf32> to vector<1x16x16xf32>
    %302 = vector.shape_cast %301 : vector<1x16x16xf32> to vector<16x16xf32>
    %cst_90 = arith.constant 0.000000e+00 : f32
    %303 = vector.broadcast %cst_90 : f32 to vector<16x16xf32>
    %304 = arith.select %300, %302, %303 : vector<16x16xi1>, vector<16x16xf32>
    %305 = arith.addf %298, %304 : vector<16x16xf32>
    %cst_91 = arith.constant 3.000000e+01 : f32
    %306 = vector.broadcast %cst_91 : f32 to vector<16x16xf32>
    %307 = arith.cmpf oeq, %290, %306 : vector<16x16xf32>
    %308 = vector.extract_strided_slice %7 {offsets = [2, 0, 0], sizes = [1, 16, 16], strides = [1, 1, 1]} : vector<4x16x16xf32> to vector<1x16x16xf32>
    %309 = vector.shape_cast %308 : vector<1x16x16xf32> to vector<16x16xf32>
    %cst_92 = arith.constant 0.000000e+00 : f32
    %310 = vector.broadcast %cst_92 : f32 to vector<16x16xf32>
    %311 = arith.select %307, %309, %310 : vector<16x16xi1>, vector<16x16xf32>
    %312 = arith.addf %305, %311 : vector<16x16xf32>
    %cst_93 = arith.constant 4.000000e+01 : f32
    %313 = vector.broadcast %cst_93 : f32 to vector<16x16xf32>
    %314 = arith.cmpf oeq, %290, %313 : vector<16x16xf32>
    %315 = vector.extract_strided_slice %7 {offsets = [3, 0, 0], sizes = [1, 16, 16], strides = [1, 1, 1]} : vector<4x16x16xf32> to vector<1x16x16xf32>
    %316 = vector.shape_cast %315 : vector<1x16x16xf32> to vector<16x16xf32>
    %cst_94 = arith.constant 0.000000e+00 : f32
    %317 = vector.broadcast %cst_94 : f32 to vector<16x16xf32>
    %318 = arith.select %314, %316, %317 : vector<16x16xi1>, vector<16x16xf32>
    %319 = arith.addf %312, %318 : vector<16x16xf32>
    %cst_95 = arith.constant 0.456210941 : f32
    %320 = vector.broadcast %cst_95 : f32 to vector<16x16xf32>
    %321 = arith.mulf %320, %319 : vector<16x16xf32>
    %322 = arith.addf %283, %321 : vector<16x16xf32>
    %323 = arith.cmpf oeq, %290, %14 : vector<16x16xf32>
    %324 = arith.extui %323 : vector<16x16xi1> to vector<16x16xi32>
    %325 = arith.sitofp %324 : vector<16x16xi32> to vector<16x16xf32>
    %cst_96 = arith.constant 0.456210941 : f32
    %326 = vector.broadcast %cst_96 : f32 to vector<16x16xf32>
    %327 = arith.mulf %326, %325 : vector<16x16xf32>
    %328 = arith.addf %289, %327 : vector<16x16xf32>
    %cst_97 = arith.constant 0.000000e+00 : f32
    %329 = vector.broadcast %cst_97 : f32 to vector<16x16xf32>
    %cst_98 = arith.constant 1.000000e+01 : f32
    %330 = vector.broadcast %cst_98 : f32 to vector<16x16xf32>
    %331 = arith.cmpf oeq, %14, %330 : vector<16x16xf32>
    %332 = vector.extract_strided_slice %7 {offsets = [0, 0, 0], sizes = [1, 16, 16], strides = [1, 1, 1]} : vector<4x16x16xf32> to vector<1x16x16xf32>
    %333 = vector.shape_cast %332 : vector<1x16x16xf32> to vector<16x16xf32>
    %cst_99 = arith.constant 0.000000e+00 : f32
    %334 = vector.broadcast %cst_99 : f32 to vector<16x16xf32>
    %335 = arith.select %331, %333, %334 : vector<16x16xi1>, vector<16x16xf32>
    %336 = arith.addf %329, %335 : vector<16x16xf32>
    %cst_100 = arith.constant 2.000000e+01 : f32
    %337 = vector.broadcast %cst_100 : f32 to vector<16x16xf32>
    %338 = arith.cmpf oeq, %14, %337 : vector<16x16xf32>
    %339 = vector.extract_strided_slice %7 {offsets = [1, 0, 0], sizes = [1, 16, 16], strides = [1, 1, 1]} : vector<4x16x16xf32> to vector<1x16x16xf32>
    %340 = vector.shape_cast %339 : vector<1x16x16xf32> to vector<16x16xf32>
    %cst_101 = arith.constant 0.000000e+00 : f32
    %341 = vector.broadcast %cst_101 : f32 to vector<16x16xf32>
    %342 = arith.select %338, %340, %341 : vector<16x16xi1>, vector<16x16xf32>
    %343 = arith.addf %336, %342 : vector<16x16xf32>
    %cst_102 = arith.constant 3.000000e+01 : f32
    %344 = vector.broadcast %cst_102 : f32 to vector<16x16xf32>
    %345 = arith.cmpf oeq, %14, %344 : vector<16x16xf32>
    %346 = vector.extract_strided_slice %7 {offsets = [2, 0, 0], sizes = [1, 16, 16], strides = [1, 1, 1]} : vector<4x16x16xf32> to vector<1x16x16xf32>
    %347 = vector.shape_cast %346 : vector<1x16x16xf32> to vector<16x16xf32>
    %cst_103 = arith.constant 0.000000e+00 : f32
    %348 = vector.broadcast %cst_103 : f32 to vector<16x16xf32>
    %349 = arith.select %345, %347, %348 : vector<16x16xi1>, vector<16x16xf32>
    %350 = arith.addf %343, %349 : vector<16x16xf32>
    %cst_104 = arith.constant 4.000000e+01 : f32
    %351 = vector.broadcast %cst_104 : f32 to vector<16x16xf32>
    %352 = arith.cmpf oeq, %14, %351 : vector<16x16xf32>
    %353 = vector.extract_strided_slice %7 {offsets = [3, 0, 0], sizes = [1, 16, 16], strides = [1, 1, 1]} : vector<4x16x16xf32> to vector<1x16x16xf32>
    %354 = vector.shape_cast %353 : vector<1x16x16xf32> to vector<16x16xf32>
    %cst_105 = arith.constant 0.000000e+00 : f32
    %355 = vector.broadcast %cst_105 : f32 to vector<16x16xf32>
    %356 = arith.select %352, %354, %355 : vector<16x16xi1>, vector<16x16xf32>
    %357 = arith.addf %350, %356 : vector<16x16xf32>
    %cst_106 = arith.constant 6.02418518 : f32
    %358 = vector.broadcast %cst_106 : f32 to vector<16x16xf32>
    %359 = arith.subf %358, %328 : vector<16x16xf32>
    %360 = arith.mulf %359, %357 : vector<16x16xf32>
    %361 = arith.addf %322, %360 : vector<16x16xf32>
    %cst_107 = arith.constant 5.35483122 : f32
    %362 = vector.broadcast %cst_107 : f32 to vector<16x16xf32>
    %363 = arith.subf %362, %328 : vector<16x16xf32>
    %cst_108 = arith.constant 6.02418518 : f32
    %364 = vector.broadcast %cst_108 : f32 to vector<16x16xf32>
    %365 = arith.addf %363, %364 : vector<16x16xf32>
    %cst_109 = arith.constant 1.000000e-07 : f32
    %366 = vector.broadcast %cst_109 : f32 to vector<16x16xf32>
    %367 = arith.maximumf %365, %366 : vector<16x16xf32>
    %368 = arith.divf %361, %367 : vector<16x16xf32>
    %369 = arith.subf %10, %368 : vector<16x16xf32>
    %370 = vector.shape_cast %369 : vector<16x16xf32> to vector<1x16x16xf32>
    %cst_110 = arith.constant dense<0.000000e+00> : vector<1xf32>
    %371 = vector.multi_reduction <add>, %370, %cst_110 [1, 2] : vector<1x16x16xf32> to vector<1xf32>
    %372 = vector.shape_cast %371 : vector<1xf32> to vector<1x1x1xf32>
    %373 = vector.extract %372[0, 0, 0] : f32 from vector<1x1x1xf32>
    %374 = vector.broadcast %373 : f32 to vector<1x1xf32>
    %c0_111 = arith.constant 0 : index
    %c0_112 = arith.constant 0 : index
    %c0_113 = arith.constant 0 : index
    %c0_114 = arith.constant 0 : index
    %375 = vector.load %arg4[%c0_111, %c0_112, %c0_113, %c0_114] : memref<1x1x1x1xf32, #tpu.memory_space<vmem>>, vector<1x1x1x1xf32>
    %376 = vector.shape_cast %375 : vector<1x1x1x1xf32> to vector<1x1xf32>
    %377 = vector.shape_cast %374 : vector<1x1xf32> to vector<1x1x1x1xf32>
    tpu.vector_store %arg4[%c0_111, %c0_112, %c0_113, %c0_114], %377 {strides = array<i32>} : memref<1x1x1x1xf32, #tpu.memory_space<vmem>>, vector<1x1x1x1xf32>,
    return
  }
  func.func @transform_0(%arg0: i32, %arg1: i32) -> (i32, i32, i32, i32) {
    %c0_i32 = arith.constant 0 : i32
    %c0_i32_0 = arith.constant 0 : i32
    %c0_i32_1 = arith.constant 0 : i32
    return %arg0, %c0_i32, %arg1, %c0_i32_0 : i32, i32, i32, i32
  }
  func.func @transform_1(%arg0: i32, %arg1: i32) -> (i32, i32, i32, i32) {
    %c0_i32 = arith.constant 0 : i32
    %c0_i32_0 = arith.constant 0 : i32
    %c0_i32_1 = arith.constant 0 : i32
    %c0_i32_2 = arith.constant 0 : i32
    return %arg0, %c0_i32, %c0_i32_0, %c0_i32_1 : i32, i32, i32, i32
  }
  func.func @transform_2(%arg0: i32, %arg1: i32) -> (i32, i32, i32, i32) {
    %c0_i32 = arith.constant 0 : i32
    %c0_i32_0 = arith.constant 0 : i32
    %c0_i32_1 = arith.constant 0 : i32
    return %arg0, %arg1, %c0_i32, %c0_i32_0 : i32, i32, i32, i32
  }
}

</mosaic_0001>

<llo_original>
// kernel: tpu_custom_call.1
$region0: #{tpu_custom_call.1}
  #allocation0 [shape = 'u32[]', space=smem, size = 0x4, offset = 0x4, fixed_abs, tag = 'smem constant byte address 0x4 - core index']
  #allocation1 [shape = 'u32[144,128]{1,0:T(1,128)}', space=vmem, size = 0x12000, scoped, tag = 'internal scratch']
  %s0 = inlined_call_operand.hbm [shape: f32[2,4,16,16], index: 0, kind: input, shape index: {}]
  %s1 = inlined_call_operand.vmem [shape: f32[2,1,18,18], index: 1, kind: input, shape index: {}]
  %s2 = inlined_call_operand.vmem [shape: f32[2,1,1,1], index: 2, kind: output, shape index: {}]
  %s3 = sld [smem:[#allocation0]]
  $region45: #{tpu_custom_call.1} parent=0
    _
  %s5 = ssub.s32 1, %s3
  %s6 = scalar_select 0, %s5, %s3
  $region1: #{tpu_custom_call.1} parent=0
    #allocation2 [shape = 'u8[65536]{0}', space=vmem, size = 0x10000, scoped, tag = 'input window, operand 0']
    #allocation3 [shape = 's32[2]{0}', space=sflag, size = 0x8, scoped, tag = 'scoped memory for tpu_custom_call.1']
    %7 = vsyncpa [#allocation3], 0
    %s8 = scalar_lea.sflag [#allocation3], 1
    %9 = vsyncpa %s8, 0
    loop: start=0, step=1, limit=4
    $region2: #{tpu_custom_call.1} parent=1 // loop_pre_header
      _
    $region3: #{tpu_custom_call.1} parent=1 // loop_header
      %s11 = sphi 0, %s15
      %p12 = scmp.ge.s32.totalorder %s11, 4
      %s18 = sphi 0, %s30
      %s19 = sphi 0, %s26
      %s20 = sphi 0, %s18
      %s21 = sphi 0, %s19
      %s22 = sphi 0, %s20
      %s23 = sphi 0, %s21
      %s35 = sphi 0, %s37
      %s38 = sphi 0, %s35
      %s39 = sphi 0, %s38
      %s55 = sphi 0, %s39
      %s61 = sphi 0, %s63
      %s64 = sphi 0, %s61
      %s65 = sphi 0, %s64
      %s81 = sphi 0, %s65
      %s89 = sphi 0, %s91
      %s92 = sphi 0, %s89
      %s93 = sphi 0, %s92
      %s109 = sphi 0, %s93
    $region4: #{tpu_custom_call.1} parent=1 // loop_header_branch
      %14 = sbr.rel (%p12) target = $region8
    $region5: #{tpu_custom_call.1} parent=1 // loop_body
      %s16 = ssub.s32 %s11, 1
      %s17 = ssub.s32 %s11, 2
      %s24 = sadd.s32 1, %s19
      %p25 = scmp.ge.s32.totalorder %s24, 1
      %s26 = scalar_select %p25, 0, %s24
      %s27 = sadd.s32 1, %s18
      %s28 = scalar_select %p25, %s27, %s18
      %p29 = scmp.ge.s32.totalorder %s28, 2
      %s30 = scalar_select %p29, 0, %s28
      %s31 = ssub.s32 %s18, %s30
      %s32 = ssub.s32 %s19, %s26
      %s33 = sor.u32 %s31, %s32
      %p34 = scmp.eq.s32.totalorder %s33, 0
      %s36 = sadd.s32 %s35, 1
      %s37 = scalar_select %p34, %s35, %s36
      %p40 = pneg %p34
      %p41 = scmp.eq.s32.totalorder %s11, 1
      %p42 = por %p40, %p41
      %p43 = scmp.ne.s32.totalorder %s35, %s38
      %p44 = scmp.eq.s32.totalorder %s11, 0
      %p45 = por %p43, %p44
      %p46 = scmp.ne.s32.totalorder %s35, %s38
      %p47 = scmp.eq.s32.totalorder %s16, 1
      %p48 = por %p46, %p47
      %p49 = scmp.ne.s32.totalorder %s38, %s39
      %p50 = scmp.eq.s32.totalorder %s16, 0
      %p51 = por %p49, %p50
      %p52 = scmp.ne.s32.totalorder %s38, %s39
      %p53 = scmp.eq.s32.totalorder %s17, 1
      %p54 = por %p52, %p53
      %p56 = scmp.ne.s32.totalorder %s39, %s55
      %p57 = scmp.eq.s32.totalorder %s17, 0
      %p58 = por %p56, %p57
      %s59 = ssub.s32 %s18, %s30
      %p60 = scmp.eq.s32.totalorder %s59, 0
      %s62 = sadd.s32 %s61, 1
      %s63 = scalar_select %p60, %s61, %s62
      %p66 = pneg %p60
      %p67 = scmp.eq.s32.totalorder %s11, 1
      %p68 = por %p66, %p67
      %p69 = scmp.ne.s32.totalorder %s61, %s64
      %p70 = scmp.eq.s32.totalorder %s11, 0
      %p71 = por %p69, %p70
      %p72 = scmp.ne.s32.totalorder %s61, %s64
      %p73 = scmp.eq.s32.totalorder %s16, 1
      %p74 = por %p72, %p73
      %p75 = scmp.ne.s32.totalorder %s64, %s65
      %p76 = scmp.eq.s32.totalorder %s16, 0
      %p77 = por %p75, %p76
      %p78 = scmp.ne.s32.totalorder %s64, %s65
      %p79 = scmp.eq.s32.totalorder %s17, 1
      %p80 = por %p78, %p79
      %p82 = scmp.ne.s32.totalorder %s65, %s81
      %p83 = scmp.eq.s32.totalorder %s17, 0
      %p84 = por %p82, %p83
      %s85 = ssub.s32 %s18, %s30
      %s86 = ssub.s32 %s19, %s26
      %s87 = sor.u32 %s85, %s86
      %p88 = scmp.eq.s32.totalorder %s87, 0
      %s90 = sadd.s32 %s89, 1
      %s91 = scalar_select %p88, %s89, %s90
      %p94 = pneg %p88
      %p95 = scmp.eq.s32.totalorder %s11, 1
      %p96 = por %p94, %p95
      %p97 = scmp.ne.s32.totalorder %s89, %s92
      %p98 = scmp.eq.s32.totalorder %s11, 0
      %p99 = por %p97, %p98
      %p100 = scmp.ne.s32.totalorder %s89, %s92
      %p101 = scmp.eq.s32.totalorder %s16, 1
      %p102 = por %p100, %p101
      %p103 = scmp.ne.s32.totalorder %s92, %s93
      %p104 = scmp.eq.s32.totalorder %s16, 0
      %p105 = por %p103, %p104
      %p106 = scmp.ne.s32.totalorder %s92, %s93
      %p107 = scmp.eq.s32.totalorder %s17, 1
      %p108 = por %p106, %p107
      %p110 = scmp.ne.s32.totalorder %s93, %s109
      %p111 = scmp.eq.s32.totalorder %s17, 0
      %p112 = por %p110, %p111
      %p113 = scmp.le.s32.totalorder 1, %s11
      %p114 = scmp.lt.s32.totalorder %s11, 3
      %p115 = pnand %p113, %p114
      %p116 = pneg %p115
      // Predicated region
      $region9: #{tpu_custom_call.1} parent=5 // pred_check
        _
      $region10: #{tpu_custom_call.1} parent=5 // pred_check_branch
        %118 = sbr.rel (%p115) target = $region12
      $region11: #{tpu_custom_call.1} parent=5 // pred_region
        %s119 = ssub.s32 %s11, 1
      $region12: #{tpu_custom_call.1} parent=5 // pred_fallthru
        _
      %p120 = scmp.lt.s32.totalorder %s11, 2
      // Predicated region
      $region13: #{tpu_custom_call.1} parent=5 // pred_check
        %p121 = pneg %p120
      $region14: #{tpu_custom_call.1} parent=5 // pred_check_branch
        %123 = sbr.rel (%p121) target = $region16
      $region15: #{tpu_custom_call.1} parent=5 // pred_region
        // Predicated region
        $region17: #{tpu_custom_call.1} parent=15 // pred_check
          %p124 = pneg %p45
        $region18: #{tpu_custom_call.1} parent=15 // pred_check_branch
          %126 = sbr.rel (%p124) target = $region20
        $region19: #{tpu_custom_call.1} parent=15 // pred_region
          %s127 = sand.u32 %s35, 1
          %s128 = scalar_lea.sflag [#allocation3], %s127
          %s129 = sand.u32 %s35, 1
          %s130 = smul.addr %s129, 64
          %s131 = scalar_lea.vmem [#allocation2], %s130
          %s132 = smul.u32 2, %s19
          %s134 = ssub.s32 1024, 1024
          %135 = vsyncadd %s128, %s134
          %s136 = smul.addr %s18, 8
          %s137 = sadd.s32 %s132, %s136
          %s138 = smul.addr %s137, 128
          %s139 = scalar_lea.hbm %s0, %s138
          %s140 = sshll.u32 %s131, 4
          %s141 = int_to_ptr.vmem [resolvable:$true] %s140
          %146 = dma.hbm_to_vmem [thread:$0]  %s139, 1024, %s141, %s128, 128, 128, 8
        $region20: #{tpu_custom_call.1} parent=15 // pred_fallthru
          _
        // Predicated region
        $region21: #{tpu_custom_call.1} parent=15 // pred_check
          %p147 = pneg %p71
        $region22: #{tpu_custom_call.1} parent=15 // pred_check_branch
          %149 = sbr.rel (%p147) target = $region24
        $region23: #{tpu_custom_call.1} parent=15 // pred_region
          %p150 = scmp.lt.s32.totalorder %s18, 1
          %s151 = scalar_select %p150, %s18, 1
          %s152 = smul.addr %s151, 3
          %s153 = smul.addr %s152, 8
          %s154 = scalar_lea.vmem %s1, %s153
        $region24: #{tpu_custom_call.1} parent=15 // pred_fallthru
          _
      $region16: #{tpu_custom_call.1} parent=5 // pred_fallthru
        _
      %p155 = scmp.le.s32.totalorder 1, %s11
      %p156 = scmp.lt.s32.totalorder %s11, 3
      %p157 = pnand %p155, %p156
      %p158 = pneg %p157
      // Predicated region
      $region25: #{tpu_custom_call.1} parent=5 // pred_check
        _
      $region26: #{tpu_custom_call.1} parent=5 // pred_check_branch
        %160 = sbr.rel (%p157) target = $region28
      $region27: #{tpu_custom_call.1} parent=5 // pred_region
        %s161 = ssub.s32 %s11, 1
        %s162 = sand.u32 %s38, 1
        %s163 = scalar_lea.sflag [#allocation3], %s162
        %s164 = sand.u32 %s38, 1
        %s165 = smul.addr %s164, 64
        %s166 = scalar_lea.vmem [#allocation2], %s165
        // Predicated region
        $region29: #{tpu_custom_call.1} parent=27 // pred_check
          %p167 = pneg %p51
        $region30: #{tpu_custom_call.1} parent=27 // pred_check_branch
          %169 = sbr.rel (%p167) target = $region32
        $region31: #{tpu_custom_call.1} parent=27 // pred_region
          %170 = dma.done %s163, 1024
        $region32: #{tpu_custom_call.1} parent=27 // pred_fallthru
          _
        %s171 = sand.u32 %s38, 1
        %s172 = scalar_lea.sflag [#allocation3], %s171
        %s173 = sand.u32 %s38, 1
        %s174 = smul.addr %s173, 64
        %s175 = scalar_lea.vmem [#allocation2], %s174
        %p176 = pneg %p51
        %p177 = pneg %p48
        %p178 = scmp.lt.s32.totalorder %s20, 1
        %s179 = scalar_select %p178, %s20, 1
        %s180 = smul.addr %s179, 3
        %s181 = smul.addr %s180, 8
        %s182 = scalar_lea.vmem %s1, %s181
        %p183 = pneg %p77
        %p184 = pneg %p74
        %p185 = pneg %p105
        %p186 = pneg %p102
        %p187 = scmp.lt.s32.totalorder %s20, 1
        %s188 = scalar_select %p187, %s20, 1
        %p189 = scmp.lt.s32.totalorder %s21, 0
        %s190 = scalar_select %p189, %s21, 0
        %s191 = sadd.s32 %s190, %s188
        %s192 = scalar_lea.vmem %s2, %s191
        %s193 = smul.u32 2, %s21
        %p194 = scmp.lt.s32.totalorder %s20, 1
        %s195 = scalar_select %p194, %s20, 1
        %s196 = smul.addr %s195, 3
        %s197 = smul.addr %s196, 8
        %s198 = scalar_lea.vmem %s1, %s197
        %p199 = scmp.lt.s32.totalorder %s20, 1
        %s200 = scalar_select %p199, %s20, 1
        %p201 = scmp.lt.s32.totalorder %s21, 0
        %s202 = scalar_select %p201, %s21, 0
        %s203 = sadd.s32 %s202, %s200
        %s204 = scalar_lea.vmem %s2, %s203
        %s205 = smul.u32 %s21, 16
        %v206 = vld [vmem:[%s166] sm:$0xff]
        %v207 = vld [vmem:[%s166 + $0x8] sm:$0xff]
        %v208 = vld [vmem:[%s166 + $0x10] sm:$0xff]
        %v209 = vld [vmem:[%s166 + $0x18] sm:$0xff]
        %v210 = vld [vmem:[%s166 + $0x20] sm:$0xff]
        %v211 = vld [vmem:[%s166 + $0x28] sm:$0xff]
        %v212 = vld [vmem:[%s166 + $0x30] sm:$0xff]
        %v213 = vld [vmem:[%s166 + $0x38] sm:$0xff]
        %vm214 = vcmask 130048
        %v215 = vsel %vm214, %v206, -inf
        %v216 = vsel %vm214, %v208, -inf
        %v217 = vsel %vm214, %v210, -inf
        %v218 = vmax.f32 %v215, %v217
        %v219 = vsel %vm214, %v212, -inf
        %v220 = vmax.f32 %v216, %v219
        %v221 = vmax.f32 %v218, %v220
        %v222 = vsel %vm214, %v207, -inf
        %v223 = vsel %vm214, %v209, -inf
        %v224 = vsel %vm214, %v211, -inf
        %v225 = vmax.f32 %v222, %v224
        %v226 = vsel %vm214, %v213, -inf
        %v227 = vmax.f32 %v223, %v226
        %v228 = vmax.f32 %v225, %v227
        %v229 = vsub.f32 %v206, %v221
        %v230 = vsub.f32 %v207, %v228
        %v231 = vsub.f32 %v208, %v221
        %v232 = vsub.f32 %v209, %v228
        %v233 = vsub.f32 %v210, %v221
        %v234 = vsub.f32 %v211, %v228
        %v235 = vsub.f32 %v212, %v221
        %v236 = vsub.f32 %v213, %v228
        %v237 = vmul.f32 %v229, 1.442695
        %v238 = vpow.pop %v237
        %v239 = vmul.f32 %v230, 1.442695
        %v240 = vpow.pop %v239
        %v241 = vmul.f32 %v231, 1.442695
        %v242 = vpow.pop %v241
        %v243 = vmul.f32 %v232, 1.442695
        %v244 = vpow.pop %v243
        %v245 = vmul.f32 %v233, 1.442695
        %v246 = vpow.pop %v245
        %v247 = vmul.f32 %v234, 1.442695
        %v248 = vpow.pop %v247
        %v249 = vmul.f32 %v235, 1.442695
        %v250 = vpow.pop %v249
        %v251 = vmul.f32 %v236, 1.442695
        %v252 = vpow.pop %v251
        %v253 = vsel %vm214, %v238, 0.0
        %v254 = vsel %vm214, %v242, 0.0
        %v255 = vadd.f32 %v253, %v254
        %v256 = vsel %vm214, %v246, 0.0
        %v257 = vadd.f32 %v255, %v256
        %v258 = vsel %vm214, %v250, 0.0
        %v259 = vadd.f32 %v257, %v258
        %v260 = vsel %vm214, %v240, 0.0
        %v261 = vsel %vm214, %v244, 0.0
        %v262 = vadd.f32 %v260, %v261
        %v263 = vsel %vm214, %v248, 0.0
        %v264 = vadd.f32 %v262, %v263
        %v265 = vsel %vm214, %v252, 0.0
        %v266 = vadd.f32 %v264, %v265
        %v267 = vlog2.pop %v259
        %v268 = vmul.f32 %v267, 0.6931472
        %v269 = vlog2.pop %v266
        %v270 = vmul.f32 %v269, 0.6931472
        %s271 = scalar_lea.vmem %s198, %s205
        %v272 = vld [vmem:[%s271] sm:$0xff]
        %v273 = vld [vmem:[%s271 + $0x8] sm:$0xff]
        %v274 = vld [vmem:[%s271 + $0x10] sm:$0x3]
        %vm275 = vcmp.eq.f32.partialorder %v272, 10.0
        %vm276 = vcmp.eq.f32.partialorder %v273, 10.0
        %v277 = vsel %vm275, %v229, 0.0
        %v278 = vsel %vm276, %v230, 0.0
        %v279 = vadd.f32 %v277, 0.0
        %v280 = vadd.f32 %v278, 0.0
        %vm281 = vcmp.eq.f32.partialorder %v272, 20.0
        %vm282 = vcmp.eq.f32.partialorder %v273, 20.0
        %v283 = vsel %vm281, %v231, 0.0
        %v284 = vsel %vm282, %v232, 0.0
        %v285 = vadd.f32 %v279, %v283
        %v286 = vadd.f32 %v280, %v284
        %vm287 = vcmp.eq.f32.partialorder %v272, 30.0
        %vm288 = vcmp.eq.f32.partialorder %v273, 30.0
        %v289 = vsel %vm287, %v233, 0.0
        %v290 = vsel %vm288, %v234, 0.0
        %v291 = vadd.f32 %v285, %v289
        %v292 = vadd.f32 %v286, %v290
        %vm293 = vcmp.eq.f32.partialorder %v272, 40.0
        %vm294 = vcmp.eq.f32.partialorder %v273, 40.0
        %v295 = vsel %vm293, %v235, 0.0
        %v296 = vsel %vm294, %v236, 0.0
        %v297 = vadd.f32 %v291, %v295
        %v298 = vadd.f32 %v292, %v296
        %v299 = vmul.f32 %v297, 0.45621094
        %v300 = vmul.f32 %v298, 0.45621094
        %v301 = vadd.f32 %v299, 0.0
        %v302 = vadd.f32 %v300, 0.0
        %vm306 = vcmask 1046528
        %v307 = vrot.slane %v272, 1
        %v308 = vrot.slane %v273, 1
        %v309 = vsel %vm306, %v307, %v308
        %v310 = vrot.slane %v274, 1
        %v311 = vsel %vm306, %v308, %v310
        %312 = vrot.lane.b32.xlu0 %v309, 127
        %v313 = vpop.permute.xlu0 %312
        %314 = vrot.lane.b32.xlu0 %v311, 127
        %v315 = vpop.permute.xlu0 %314
        %vm318 = vcmp.eq.f32.partialorder %v272, %v313
        %vm319 = vcmp.eq.f32.partialorder %v273, %v315
        %v320 = vsel %vm318, 1, 0
        %v321 = vsel %vm319, 1, 0
        %v322 = vcvt.s32.f32 %v320
        %v323 = vcvt.s32.f32 %v321
        %v324 = vmul.f32 %v322, 0.45621094
        %v325 = vmul.f32 %v323, 0.45621094
        %v326 = vadd.f32 %v324, 0.0
        %v327 = vadd.f32 %v325, 0.0
        %330 = vrot.lane.b32.xlu0 %v229, 1
        %v331 = vpop.permute.xlu0 %330
        %332 = vrot.lane.b32.xlu0 %v230, 1
        %v333 = vpop.permute.xlu0 %332
        %v336 = vsel %vm275, %v331, 0.0
        %v337 = vsel %vm276, %v333, 0.0
        %v338 = vadd.f32 %v336, 0.0
        %v339 = vadd.f32 %v337, 0.0
        %342 = vrot.lane.b32.xlu0 %v231, 1
        %v343 = vpop.permute.xlu0 %342
        %344 = vrot.lane.b32.xlu0 %v232, 1
        %v345 = vpop.permute.xlu0 %344
        %v348 = vsel %vm281, %v343, 0.0
        %v349 = vsel %vm282, %v345, 0.0
        %v350 = vadd.f32 %v338, %v348
        %v351 = vadd.f32 %v339, %v349
        %354 = vrot.lane.b32.xlu0 %v233, 1
        %v355 = vpop.permute.xlu0 %354
        %356 = vrot.lane.b32.xlu0 %v234, 1
        %v357 = vpop.permute.xlu0 %356
        %v360 = vsel %vm287, %v355, 0.0
        %v361 = vsel %vm288, %v357, 0.0
        %v362 = vadd.f32 %v350, %v360
        %v363 = vadd.f32 %v351, %v361
        %366 = vrot.lane.b32.xlu0 %v235, 1
        %v367 = vpop.permute.xlu0 %366
        %368 = vrot.lane.b32.xlu0 %v236, 1
        %v369 = vpop.permute.xlu0 %368
        %v372 = vsel %vm293, %v367, 0.0
        %v373 = vsel %vm294, %v369, 0.0
        %v374 = vadd.f32 %v362, %v372
        %v375 = vadd.f32 %v363, %v373
        %v376 = vmul.f32 %v374, 0.8824969
        %v377 = vmul.f32 %v375, 0.8824969
        %380 = vrot.lane.b32.xlu0 %v376, 127
        %v381 = vpop.permute.xlu0 %380
        %382 = vrot.lane.b32.xlu0 %v377, 127
        %v383 = vpop.permute.xlu0 %382
        %v386 = vadd.f32 %v301, %v381
        %v387 = vadd.f32 %v302, %v383
        %vm390 = vcmp.eq.f32.partialorder %v272, %v309
        %vm391 = vcmp.eq.f32.partialorder %v273, %v311
        %v392 = vsel %vm390, 1, 0
        %v393 = vsel %vm391, 1, 0
        %v394 = vcvt.s32.f32 %v392
        %v395 = vcvt.s32.f32 %v393
        %v396 = vmul.f32 %v394, 0.8824969
        %v397 = vmul.f32 %v395, 0.8824969
        %400 = vrot.lane.b32.xlu0 %v396, 127
        %v401 = vpop.permute.xlu0 %400
        %402 = vrot.lane.b32.xlu0 %v397, 127
        %v403 = vpop.permute.xlu0 %402
        %v406 = vadd.f32 %v326, %v401
        %v407 = vadd.f32 %v327, %v403
        %408 = vrot.lane.b32.xlu0 %v229, 2
        %v409 = vpop.permute.xlu0 %408
        %410 = vrot.lane.b32.xlu0 %v230, 2
        %v411 = vpop.permute.xlu0 %410
        %v414 = vsel %vm275, %v409, 0.0
        %v415 = vsel %vm276, %v411, 0.0
        %v416 = vadd.f32 %v414, 0.0
        %v417 = vadd.f32 %v415, 0.0
        %418 = vrot.lane.b32.xlu0 %v231, 2
        %v419 = vpop.permute.xlu0 %418
        %420 = vrot.lane.b32.xlu0 %v232, 2
        %v421 = vpop.permute.xlu0 %420
        %v424 = vsel %vm281, %v419, 0.0
        %v425 = vsel %vm282, %v421, 0.0
        %v426 = vadd.f32 %v416, %v424
        %v427 = vadd.f32 %v417, %v425
        %428 = vrot.lane.b32.xlu0 %v233, 2
        %v429 = vpop.permute.xlu0 %428
        %430 = vrot.lane.b32.xlu0 %v234, 2
        %v431 = vpop.permute.xlu0 %430
        %v434 = vsel %vm287, %v429, 0.0
        %v435 = vsel %vm288, %v431, 0.0
        %v436 = vadd.f32 %v426, %v434
        %v437 = vadd.f32 %v427, %v435
        %438 = vrot.lane.b32.xlu0 %v235, 2
        %v439 = vpop.permute.xlu0 %438
        %440 = vrot.lane.b32.xlu0 %v236, 2
        %v441 = vpop.permute.xlu0 %440
        %v444 = vsel %vm293, %v439, 0.0
        %v445 = vsel %vm294, %v441, 0.0
        %v446 = vadd.f32 %v436, %v444
        %v447 = vadd.f32 %v437, %v445
        %v448 = vmul.f32 %v446, 0.45621094
        %v449 = vmul.f32 %v447, 0.45621094
        %452 = vrot.lane.b32.xlu0 %v448, 126
        %v453 = vpop.permute.xlu0 %452
        %454 = vrot.lane.b32.xlu0 %v449, 126
        %v455 = vpop.permute.xlu0 %454
        %v458 = vadd.f32 %v386, %v453
        %v459 = vadd.f32 %v387, %v455
        %460 = vrot.lane.b32.xlu0 %v309, 1
        %v461 = vpop.permute.xlu0 %460
        %462 = vrot.lane.b32.xlu0 %v311, 1
        %v463 = vpop.permute.xlu0 %462
        %vm466 = vcmp.eq.f32.partialorder %v272, %v461
        %vm467 = vcmp.eq.f32.partialorder %v273, %v463
        %v468 = vsel %vm466, 1, 0
        %v469 = vsel %vm467, 1, 0
        %v470 = vcvt.s32.f32 %v468
        %v471 = vcvt.s32.f32 %v469
        %v472 = vmul.f32 %v470, 0.45621094
        %v473 = vmul.f32 %v471, 0.45621094
        %476 = vrot.lane.b32.xlu0 %v472, 126
        %v477 = vpop.permute.xlu0 %476
        %478 = vrot.lane.b32.xlu0 %v473, 126
        %v479 = vpop.permute.xlu0 %478
        %v482 = vadd.f32 %v406, %v477
        %v483 = vadd.f32 %v407, %v479
        %vm484 = vcmp.eq.f32.partialorder %v274, 10.0
        %vm485 = vcmask 1040384
        %v486 = vrot.slane %v229, 7
        %v487 = vrot.slane %v230, 7
        %v488 = vsel %vm485, %v486, %v487
        %v492 = vsel %vm275, %v486, 0.0
        %v493 = vsel %vm276, %v488, 0.0
        %v494 = vsel %vm484, %v487, 0.0
        %v495 = vadd.f32 %v492, 0.0
        %v496 = vadd.f32 %v493, 0.0
        %v497 = vadd.f32 %v494, 0.0
        %vm498 = vcmp.eq.f32.partialorder %v274, 20.0
        %v499 = vrot.slane %v231, 7
        %v500 = vrot.slane %v232, 7
        %v501 = vsel %vm485, %v499, %v500
        %v505 = vsel %vm281, %v499, 0.0
        %v506 = vsel %vm282, %v501, 0.0
        %v507 = vsel %vm498, %v500, 0.0
        %v508 = vadd.f32 %v495, %v505
        %v509 = vadd.f32 %v496, %v506
        %v510 = vadd.f32 %v497, %v507
        %vm511 = vcmp.eq.f32.partialorder %v274, 30.0
        %v512 = vrot.slane %v233, 7
        %v513 = vrot.slane %v234, 7
        %v514 = vsel %vm485, %v512, %v513
        %v518 = vsel %vm287, %v512, 0.0
        %v519 = vsel %vm288, %v514, 0.0
        %v520 = vsel %vm511, %v513, 0.0
        %v521 = vadd.f32 %v508, %v518
        %v522 = vadd.f32 %v509, %v519
        %v523 = vadd.f32 %v510, %v520
        %vm524 = vcmp.eq.f32.partialorder %v274, 40.0
        %v525 = vrot.slane %v235, 7
        %v526 = vrot.slane %v236, 7
        %v527 = vsel %vm485, %v525, %v526
        %v531 = vsel %vm293, %v525, 0.0
        %v532 = vsel %vm294, %v527, 0.0
        %v533 = vsel %vm524, %v526, 0.0
        %v534 = vadd.f32 %v521, %v531
        %v535 = vadd.f32 %v522, %v532
        %v536 = vadd.f32 %v523, %v533
        %v537 = vmul.f32 %v534, 0.8824969
        %v538 = vmul.f32 %v535, 0.8824969
        %v539 = vmul.f32 %v536, 0.8824969
        %v543 = vrot.slane %v537, 1
        %v544 = vrot.slane %v538, 1
        %v545 = vsel %vm306, %v543, %v544
        %v546 = vrot.slane %v539, 1
        %v547 = vsel %vm306, %v544, %v546
        %v550 = vadd.f32 %v458, %v545
        %v551 = vadd.f32 %v459, %v547
        %552 = vrot.lane.b32.xlu0 %v272, 127
        %v553 = vpop.permute.xlu0 %552
        %554 = vrot.lane.b32.xlu0 %v273, 127
        %v555 = vpop.permute.xlu0 %554
        %556 = vrot.lane.b32.xlu0 %v274, 127
        %v557 = vpop.permute.xlu0 %556
        %vm561 = vcmp.eq.f32.partialorder %v272, %v553
        %vm562 = vcmp.eq.f32.partialorder %v273, %v555
        %vm563 = vcmp.eq.f32.partialorder %v274, %v557
        %v564 = vsel %vm561, 1, 0
        %v565 = vsel %vm562, 1, 0
        %v566 = vsel %vm563, 1, 0
        %v567 = vcvt.s32.f32 %v564
        %v568 = vcvt.s32.f32 %v565
        %v569 = vcvt.s32.f32 %v566
        %v570 = vmul.f32 %v567, 0.8824969
        %v571 = vmul.f32 %v568, 0.8824969
        %v572 = vmul.f32 %v569, 0.8824969
        %v576 = vrot.slane %v570, 1
        %v577 = vrot.slane %v571, 1
        %v578 = vsel %vm306, %v576, %v577
        %v579 = vrot.slane %v572, 1
        %v580 = vsel %vm306, %v577, %v579
        %v583 = vadd.f32 %v482, %v578
        %v584 = vadd.f32 %v483, %v580
        %585 = vrot.lane.b32.xlu0 %v486, 2
        %v586 = vpop.permute.xlu0 %585
        %587 = vrot.lane.b32.xlu0 %v488, 2
        %v588 = vpop.permute.xlu0 %587
        %589 = vrot.lane.b32.xlu0 %v487, 2
        %v590 = vpop.permute.xlu0 %589
        %v594 = vsel %vm275, %v586, 0.0
        %v595 = vsel %vm276, %v588, 0.0
        %v596 = vsel %vm484, %v590, 0.0
        %v597 = vadd.f32 %v594, 0.0
        %v598 = vadd.f32 %v595, 0.0
        %v599 = vadd.f32 %v596, 0.0
        %600 = vrot.lane.b32.xlu0 %v499, 2
        %v601 = vpop.permute.xlu0 %600
        %602 = vrot.lane.b32.xlu0 %v501, 2
        %v603 = vpop.permute.xlu0 %602
        %604 = vrot.lane.b32.xlu0 %v500, 2
        %v605 = vpop.permute.xlu0 %604
        %v609 = vsel %vm281, %v601, 0.0
        %v610 = vsel %vm282, %v603, 0.0
        %v611 = vsel %vm498, %v605, 0.0
        %v612 = vadd.f32 %v597, %v609
        %v613 = vadd.f32 %v598, %v610
        %v614 = vadd.f32 %v599, %v611
        %615 = vrot.lane.b32.xlu0 %v512, 2
        %v616 = vpop.permute.xlu0 %615
        %617 = vrot.lane.b32.xlu0 %v514, 2
        %v618 = vpop.permute.xlu0 %617
        %619 = vrot.lane.b32.xlu0 %v513, 2
        %v620 = vpop.permute.xlu0 %619
        %v624 = vsel %vm287, %v616, 0.0
        %v625 = vsel %vm288, %v618, 0.0
        %v626 = vsel %vm511, %v620, 0.0
        %v627 = vadd.f32 %v612, %v624
        %v628 = vadd.f32 %v613, %v625
        %v629 = vadd.f32 %v614, %v626
        %630 = vrot.lane.b32.xlu0 %v525, 2
        %v631 = vpop.permute.xlu0 %630
        %632 = vrot.lane.b32.xlu0 %v527, 2
        %v633 = vpop.permute.xlu0 %632
        %634 = vrot.lane.b32.xlu0 %v526, 2
        %v635 = vpop.permute.xlu0 %634
        %v639 = vsel %vm293, %v631, 0.0
        %v640 = vsel %vm294, %v633, 0.0
        %v641 = vsel %vm524, %v635, 0.0
        %v642 = vadd.f32 %v627, %v639
        %v643 = vadd.f32 %v628, %v640
        %v644 = vadd.f32 %v629, %v641
        %v645 = vmul.f32 %v642, 0.8824969
        %v646 = vmul.f32 %v643, 0.8824969
        %v647 = vmul.f32 %v644, 0.8824969
        %v651 = vrot.slane %v645, 1
        %v652 = vrot.slane %v646, 1
        %v653 = vsel %vm306, %v651, %v652
        %v654 = vrot.slane %v647, 1
        %v655 = vsel %vm306, %v652, %v654
        %656 = vrot.lane.b32.xlu0 %v653, 126
        %v657 = vpop.permute.xlu0 %656
        %658 = vrot.lane.b32.xlu0 %v655, 126
        %v659 = vpop.permute.xlu0 %658
        %v662 = vadd.f32 %v550, %v657
        %v663 = vadd.f32 %v551, %v659
        %664 = vrot.lane.b32.xlu0 %v272, 1
        %v665 = vpop.permute.xlu0 %664
        %666 = vrot.lane.b32.xlu0 %v273, 1
        %v667 = vpop.permute.xlu0 %666
        %668 = vrot.lane.b32.xlu0 %v274, 1
        %v669 = vpop.permute.xlu0 %668
        %vm673 = vcmp.eq.f32.partialorder %v272, %v665
        %vm674 = vcmp.eq.f32.partialorder %v273, %v667
        %vm675 = vcmp.eq.f32.partialorder %v274, %v669
        %v676 = vsel %vm673, 1, 0
        %v677 = vsel %vm674, 1, 0
        %v678 = vsel %vm675, 1, 0
        %v679 = vcvt.s32.f32 %v676
        %v680 = vcvt.s32.f32 %v677
        %v681 = vcvt.s32.f32 %v678
        %v682 = vmul.f32 %v679, 0.8824969
        %v683 = vmul.f32 %v680, 0.8824969
        %v684 = vmul.f32 %v681, 0.8824969
        %v688 = vrot.slane %v682, 1
        %v689 = vrot.slane %v683, 1
        %v690 = vsel %vm306, %v688, %v689
        %v691 = vrot.slane %v684, 1
        %v692 = vsel %vm306, %v689, %v691
        %693 = vrot.lane.b32.xlu0 %v690, 126
        %v694 = vpop.permute.xlu0 %693
        %695 = vrot.lane.b32.xlu0 %v692, 126
        %v696 = vpop.permute.xlu0 %695
        %v699 = vadd.f32 %v583, %v694
        %v700 = vadd.f32 %v584, %v696
        %vm701 = vcmask 1041408
        %v702 = vrot.slane %v229, 6
        %v703 = vrot.slane %v230, 6
        %v704 = vsel %vm701, %v702, %v703
        %v708 = vsel %vm275, %v702, 0.0
        %v709 = vsel %vm276, %v704, 0.0
        %v710 = vsel %vm484, %v703, 0.0
        %v711 = vadd.f32 %v708, 0.0
        %v712 = vadd.f32 %v709, 0.0
        %v713 = vadd.f32 %v710, 0.0
        %v714 = vrot.slane %v231, 6
        %v715 = vrot.slane %v232, 6
        %v716 = vsel %vm701, %v714, %v715
        %v720 = vsel %vm281, %v714, 0.0
        %v721 = vsel %vm282, %v716, 0.0
        %v722 = vsel %vm498, %v715, 0.0
        %v723 = vadd.f32 %v711, %v720
        %v724 = vadd.f32 %v712, %v721
        %v725 = vadd.f32 %v713, %v722
        %v726 = vrot.slane %v233, 6
        %v727 = vrot.slane %v234, 6
        %v728 = vsel %vm701, %v726, %v727
        %v732 = vsel %vm287, %v726, 0.0
        %v733 = vsel %vm288, %v728, 0.0
        %v734 = vsel %vm511, %v727, 0.0
        %v735 = vadd.f32 %v723, %v732
        %v736 = vadd.f32 %v724, %v733
        %v737 = vadd.f32 %v725, %v734
        %v738 = vrot.slane %v235, 6
        %v739 = vrot.slane %v236, 6
        %v740 = vsel %vm701, %v738, %v739
        %v744 = vsel %vm293, %v738, 0.0
        %v745 = vsel %vm294, %v740, 0.0
        %v746 = vsel %vm524, %v739, 0.0
        %v747 = vadd.f32 %v735, %v744
        %v748 = vadd.f32 %v736, %v745
        %v749 = vadd.f32 %v737, %v746
        %v750 = vmul.f32 %v747, 0.45621094
        %v751 = vmul.f32 %v748, 0.45621094
        %v752 = vmul.f32 %v749, 0.45621094
        %vm756 = vcmask 1045504
        %v757 = vrot.slane %v750, 2
        %v758 = vrot.slane %v751, 2
        %v759 = vsel %vm756, %v757, %v758
        %v760 = vrot.slane %v752, 2
        %v761 = vsel %vm756, %v758, %v760
        %v764 = vadd.f32 %v662, %v759
        %v765 = vadd.f32 %v663, %v761
        %v766 = vrot.slane %v272, 7
        %v767 = vrot.slane %v273, 7
        %v768 = vsel %vm485, %v766, %v767
        %v769 = vrot.slane %v274, 7
        %v770 = vsel %vm485, %v767, %v769
        %771 = vrot.lane.b32.xlu0 %v766, 127
        %v772 = vpop.permute.xlu0 %771
        %773 = vrot.lane.b32.xlu0 %v768, 127
        %v774 = vpop.permute.xlu0 %773
        %775 = vrot.lane.b32.xlu0 %v770, 127
        %v776 = vpop.permute.xlu0 %775
        %vm780 = vcmp.eq.f32.partialorder %v272, %v772
        %vm781 = vcmp.eq.f32.partialorder %v273, %v774
        %vm782 = vcmp.eq.f32.partialorder %v274, %v776
        %v783 = vsel %vm780, 1, 0
        %v784 = vsel %vm781, 1, 0
        %v785 = vsel %vm782, 1, 0
        %v786 = vcvt.s32.f32 %v783
        %v787 = vcvt.s32.f32 %v784
        %v788 = vcvt.s32.f32 %v785
        %v789 = vmul.f32 %v786, 0.45621094
        %v790 = vmul.f32 %v787, 0.45621094
        %v791 = vmul.f32 %v788, 0.45621094
        %v795 = vrot.slane %v789, 2
        %v796 = vrot.slane %v790, 2
        %v797 = vsel %vm756, %v795, %v796
        %v798 = vrot.slane %v791, 2
        %v799 = vsel %vm756, %v796, %v798
        %v802 = vadd.f32 %v699, %v797
        %v803 = vadd.f32 %v700, %v799
        %804 = vrot.lane.b32.xlu0 %v702, 1
        %v805 = vpop.permute.xlu0 %804
        %806 = vrot.lane.b32.xlu0 %v704, 1
        %v807 = vpop.permute.xlu0 %806
        %808 = vrot.lane.b32.xlu0 %v703, 1
        %v809 = vpop.permute.xlu0 %808
        %v813 = vsel %vm275, %v805, 0.0
        %v814 = vsel %vm276, %v807, 0.0
        %v815 = vsel %vm484, %v809, 0.0
        %v816 = vadd.f32 %v813, 0.0
        %v817 = vadd.f32 %v814, 0.0
        %v818 = vadd.f32 %v815, 0.0
        %819 = vrot.lane.b32.xlu0 %v714, 1
        %v820 = vpop.permute.xlu0 %819
        %821 = vrot.lane.b32.xlu0 %v716, 1
        %v822 = vpop.permute.xlu0 %821
        %823 = vrot.lane.b32.xlu0 %v715, 1
        %v824 = vpop.permute.xlu0 %823
        %v828 = vsel %vm281, %v820, 0.0
        %v829 = vsel %vm282, %v822, 0.0
        %v830 = vsel %vm498, %v824, 0.0
        %v831 = vadd.f32 %v816, %v828
        %v832 = vadd.f32 %v817, %v829
        %v833 = vadd.f32 %v818, %v830
        %834 = vrot.lane.b32.xlu0 %v726, 1
        %v835 = vpop.permute.xlu0 %834
        %836 = vrot.lane.b32.xlu0 %v728, 1
        %v837 = vpop.permute.xlu0 %836
        %838 = vrot.lane.b32.xlu0 %v727, 1
        %v839 = vpop.permute.xlu0 %838
        %v843 = vsel %vm287, %v835, 0.0
        %v844 = vsel %vm288, %v837, 0.0
        %v845 = vsel %vm511, %v839, 0.0
        %v846 = vadd.f32 %v831, %v843
        %v847 = vadd.f32 %v832, %v844
        %v848 = vadd.f32 %v833, %v845
        %849 = vrot.lane.b32.xlu0 %v738, 1
        %v850 = vpop.permute.xlu0 %849
        %851 = vrot.lane.b32.xlu0 %v740, 1
        %v852 = vpop.permute.xlu0 %851
        %853 = vrot.lane.b32.xlu0 %v739, 1
        %v854 = vpop.permute.xlu0 %853
        %v858 = vsel %vm293, %v850, 0.0
        %v859 = vsel %vm294, %v852, 0.0
        %v860 = vsel %vm524, %v854, 0.0
        %v861 = vadd.f32 %v846, %v858
        %v862 = vadd.f32 %v847, %v859
        %v863 = vadd.f32 %v848, %v860
        %v864 = vmul.f32 %v861, 0.8824969
        %v865 = vmul.f32 %v862, 0.8824969
        %v866 = vmul.f32 %v863, 0.8824969
        %v870 = vrot.slane %v864, 2
        %v871 = vrot.slane %v865, 2
        %v872 = vsel %vm756, %v870, %v871
        %v873 = vrot.slane %v866, 2
        %v874 = vsel %vm756, %v871, %v873
        %875 = vrot.lane.b32.xlu0 %v872, 127
        %v876 = vpop.permute.xlu0 %875
        %877 = vrot.lane.b32.xlu0 %v874, 127
        %v878 = vpop.permute.xlu0 %877
        %v881 = vadd.f32 %v764, %v876
        %v882 = vadd.f32 %v765, %v878
        %vm886 = vcmp.eq.f32.partialorder %v272, %v766
        %vm887 = vcmp.eq.f32.partialorder %v273, %v768
        %vm888 = vcmp.eq.f32.partialorder %v274, %v770
        %v889 = vsel %vm886, 1, 0
        %v890 = vsel %vm887, 1, 0
        %v891 = vsel %vm888, 1, 0
        %v892 = vcvt.s32.f32 %v889
        %v893 = vcvt.s32.f32 %v890
        %v894 = vcvt.s32.f32 %v891
        %v895 = vmul.f32 %v892, 0.8824969
        %v896 = vmul.f32 %v893, 0.8824969
        %v897 = vmul.f32 %v894, 0.8824969
        %v901 = vrot.slane %v895, 2
        %v902 = vrot.slane %v896, 2
        %v903 = vsel %vm756, %v901, %v902
        %v904 = vrot.slane %v897, 2
        %v905 = vsel %vm756, %v902, %v904
        %906 = vrot.lane.b32.xlu0 %v903, 127
        %v907 = vpop.permute.xlu0 %906
        %908 = vrot.lane.b32.xlu0 %v905, 127
        %v909 = vpop.permute.xlu0 %908
        %v912 = vadd.f32 %v802, %v907
        %v913 = vadd.f32 %v803, %v909
        %914 = vrot.lane.b32.xlu0 %v702, 2
        %v915 = vpop.permute.xlu0 %914
        %916 = vrot.lane.b32.xlu0 %v704, 2
        %v917 = vpop.permute.xlu0 %916
        %918 = vrot.lane.b32.xlu0 %v703, 2
        %v919 = vpop.permute.xlu0 %918
        %v923 = vsel %vm275, %v915, 0.0
        %v924 = vsel %vm276, %v917, 0.0
        %v925 = vsel %vm484, %v919, 0.0
        %v926 = vadd.f32 %v923, 0.0
        %v927 = vadd.f32 %v924, 0.0
        %v928 = vadd.f32 %v925, 0.0
        %929 = vrot.lane.b32.xlu0 %v714, 2
        %v930 = vpop.permute.xlu0 %929
        %931 = vrot.lane.b32.xlu0 %v716, 2
        %v932 = vpop.permute.xlu0 %931
        %933 = vrot.lane.b32.xlu0 %v715, 2
        %v934 = vpop.permute.xlu0 %933
        %v938 = vsel %vm281, %v930, 0.0
        %v939 = vsel %vm282, %v932, 0.0
        %v940 = vsel %vm498, %v934, 0.0
        %v941 = vadd.f32 %v926, %v938
        %v942 = vadd.f32 %v927, %v939
        %v943 = vadd.f32 %v928, %v940
        %944 = vrot.lane.b32.xlu0 %v726, 2
        %v945 = vpop.permute.xlu0 %944
        %946 = vrot.lane.b32.xlu0 %v728, 2
        %v947 = vpop.permute.xlu0 %946
        %948 = vrot.lane.b32.xlu0 %v727, 2
        %v949 = vpop.permute.xlu0 %948
        %v953 = vsel %vm287, %v945, 0.0
        %v954 = vsel %vm288, %v947, 0.0
        %v955 = vsel %vm511, %v949, 0.0
        %v956 = vadd.f32 %v941, %v953
        %v957 = vadd.f32 %v942, %v954
        %v958 = vadd.f32 %v943, %v955
        %959 = vrot.lane.b32.xlu0 %v738, 2
        %v960 = vpop.permute.xlu0 %959
        %961 = vrot.lane.b32.xlu0 %v740, 2
        %v962 = vpop.permute.xlu0 %961
        %963 = vrot.lane.b32.xlu0 %v739, 2
        %v964 = vpop.permute.xlu0 %963
        %v968 = vsel %vm293, %v960, 0.0
        %v969 = vsel %vm294, %v962, 0.0
        %v970 = vsel %vm524, %v964, 0.0
        %v971 = vadd.f32 %v956, %v968
        %v972 = vadd.f32 %v957, %v969
        %v973 = vadd.f32 %v958, %v970
        %v974 = vmul.f32 %v971, 0.45621094
        %v975 = vmul.f32 %v972, 0.45621094
        %v976 = vmul.f32 %v973, 0.45621094
        %v980 = vrot.slane %v974, 2
        %v981 = vrot.slane %v975, 2
        %v982 = vsel %vm756, %v980, %v981
        %v983 = vrot.slane %v976, 2
        %v984 = vsel %vm756, %v981, %v983
        %985 = vrot.lane.b32.xlu0 %v982, 126
        %v986 = vpop.permute.xlu0 %985
        %987 = vrot.lane.b32.xlu0 %v984, 126
        %v988 = vpop.permute.xlu0 %987
        %v991 = vadd.f32 %v881, %v986
        %v992 = vadd.f32 %v882, %v988
        %993 = vrot.lane.b32.xlu0 %v766, 1
        %v994 = vpop.permute.xlu0 %993
        %995 = vrot.lane.b32.xlu0 %v768, 1
        %v996 = vpop.permute.xlu0 %995
        %997 = vrot.lane.b32.xlu0 %v770, 1
        %v998 = vpop.permute.xlu0 %997
        %vm1002 = vcmp.eq.f32.partialorder %v272, %v994
        %vm1003 = vcmp.eq.f32.partialorder %v273, %v996
        %vm1004 = vcmp.eq.f32.partialorder %v274, %v998
        %v1005 = vsel %vm1002, 1, 0
        %v1006 = vsel %vm1003, 1, 0
        %v1007 = vsel %vm1004, 1, 0
        %v1008 = vcvt.s32.f32 %v1005
        %v1009 = vcvt.s32.f32 %v1006
        %v1010 = vcvt.s32.f32 %v1007
        %v1011 = vmul.f32 %v1008, 0.45621094
        %v1012 = vmul.f32 %v1009, 0.45621094
        %v1013 = vmul.f32 %v1010, 0.45621094
        %v1017 = vrot.slane %v1011, 2
        %v1018 = vrot.slane %v1012, 2
        %v1019 = vsel %vm756, %v1017, %v1018
        %v1020 = vrot.slane %v1013, 2
        %v1021 = vsel %vm756, %v1018, %v1020
        %1022 = vrot.lane.b32.xlu0 %v1019, 126
        %v1023 = vpop.permute.xlu0 %1022
        %1024 = vrot.lane.b32.xlu0 %v1021, 126
        %v1025 = vpop.permute.xlu0 %1024
        %v1028 = vadd.f32 %v912, %v1023
        %v1029 = vadd.f32 %v913, %v1025
        %1030 = vrot.lane.b32.xlu0 %v486, 1
        %v1031 = vpop.permute.xlu0 %1030
        %1032 = vrot.lane.b32.xlu0 %v488, 1
        %v1033 = vpop.permute.xlu0 %1032
        %1034 = vrot.lane.b32.xlu0 %v487, 1
        %v1035 = vpop.permute.xlu0 %1034
        %v1039 = vsel %vm275, %v1031, 0.0
        %v1040 = vsel %vm276, %v1033, 0.0
        %v1041 = vsel %vm484, %v1035, 0.0
        %v1042 = vadd.f32 %v1039, 0.0
        %v1043 = vadd.f32 %v1040, 0.0
        %v1044 = vadd.f32 %v1041, 0.0
        %1045 = vrot.lane.b32.xlu0 %v499, 1
        %v1046 = vpop.permute.xlu0 %1045
        %1047 = vrot.lane.b32.xlu0 %v501, 1
        %v1048 = vpop.permute.xlu0 %1047
        %1049 = vrot.lane.b32.xlu0 %v500, 1
        %v1050 = vpop.permute.xlu0 %1049
        %v1054 = vsel %vm281, %v1046, 0.0
        %v1055 = vsel %vm282, %v1048, 0.0
        %v1056 = vsel %vm498, %v1050, 0.0
        %v1057 = vadd.f32 %v1042, %v1054
        %v1058 = vadd.f32 %v1043, %v1055
        %v1059 = vadd.f32 %v1044, %v1056
        %1060 = vrot.lane.b32.xlu0 %v512, 1
        %v1061 = vpop.permute.xlu0 %1060
        %1062 = vrot.lane.b32.xlu0 %v514, 1
        %v1063 = vpop.permute.xlu0 %1062
        %1064 = vrot.lane.b32.xlu0 %v513, 1
        %v1065 = vpop.permute.xlu0 %1064
        %v1069 = vsel %vm287, %v1061, 0.0
        %v1070 = vsel %vm288, %v1063, 0.0
        %v1071 = vsel %vm511, %v1065, 0.0
        %v1072 = vadd.f32 %v1057, %v1069
        %v1073 = vadd.f32 %v1058, %v1070
        %v1074 = vadd.f32 %v1059, %v1071
        %1075 = vrot.lane.b32.xlu0 %v525, 1
        %v1076 = vpop.permute.xlu0 %1075
        %1077 = vrot.lane.b32.xlu0 %v527, 1
        %v1078 = vpop.permute.xlu0 %1077
        %1079 = vrot.lane.b32.xlu0 %v526, 1
        %v1080 = vpop.permute.xlu0 %1079
        %v1084 = vsel %vm293, %v1076, 0.0
        %v1085 = vsel %vm294, %v1078, 0.0
        %v1086 = vsel %vm524, %v1080, 0.0
        %v1087 = vadd.f32 %v1072, %v1084
        %v1088 = vadd.f32 %v1073, %v1085
        %v1089 = vadd.f32 %v1074, %v1086
        %v1090 = vsub.f32 6.024185, %v1028
        %v1091 = vsub.f32 6.024185, %v1029
        %v1095 = vrot.slane %v1087, 1
        %v1096 = vrot.slane %v1088, 1
        %v1097 = vsel %vm306, %v1095, %v1096
        %v1098 = vrot.slane %v1089, 1
        %v1099 = vsel %vm306, %v1096, %v1098
        %1100 = vrot.lane.b32.xlu0 %v1097, 127
        %v1101 = vpop.permute.xlu0 %1100
        %1102 = vrot.lane.b32.xlu0 %v1099, 127
        %v1103 = vpop.permute.xlu0 %1102
        %v1106 = vmul.f32 %v1090, %v1101
        %v1107 = vmul.f32 %v1091, %v1103
        %v1108 = vadd.f32 %v991, %v1106
        %v1109 = vadd.f32 %v992, %v1107
        %v1110 = vsub.f32 5.354831, %v1028
        %v1111 = vsub.f32 5.354831, %v1029
        %v1112 = vadd.f32 %v1110, 6.024185
        %v1113 = vadd.f32 %v1111, 6.024185
        %v1114 = vmax.f32 %v1112, 1e-07
        %v1115 = vmax.f32 %v1113, 1e-07
        %v1116 = vrcp.pop %v1114
        %v1117 = vmul.f32 %v1108, %v1116
        %v1118 = vrcp.pop %v1115
        %v1119 = vmul.f32 %v1109, %v1118
        %v1120 = vsub.f32 %v268, %v1117
        %v1121 = vsub.f32 %v270, %v1119
        %v1122 = vsel %vm214, %v1120, 0.0
        %v1123 = vsel %vm214, %v1121, 0.0
        %v1124 = vadd.f32 %v1122, %v1123
        %1125 = vadd.xlane.f32.xlu0 %v1124
        %v1126 = vpop.xlane.xlu0 %1125
        %v1127 = vrot.slane %v1126, 4
        %v1128 = vadd.f32 %v1126, %v1127
        %v1129 = vrot.slane %v1128, 2
        %v1130 = vadd.f32 %v1128, %v1129
        %v1131 = vrot.slane %v1130, 1
        %v1132 = vadd.f32 %v1130, %v1131
        %s1133 = vtos %v1132
        %v1134 = vstv %s1133
        %vm1135 = vcmask 0
        %1136 = vst.msk [vmem:[%s204] sm:$0x1] %vm1135, %v1134
        %p1137 = scmp.lt.s32.totalorder %s20, 1
        %s1138 = scalar_select %p1137, %s20, 1
        %p1139 = scmp.lt.s32.totalorder %s21, 0
        %s1140 = scalar_select %p1139, %s21, 0
        %s1141 = sadd.s32 %s1140, %s1138
        %s1142 = scalar_lea.vmem %s2, %s1141
        // Predicated region
        $region33: #{tpu_custom_call.1} parent=27 // pred_check
          %p1143 = pneg %p102
        $region34: #{tpu_custom_call.1} parent=27 // pred_check_branch
          %1145 = sbr.rel (%p1143) target = $region36
        $region35: #{tpu_custom_call.1} parent=27 // pred_region
          _
        $region36: #{tpu_custom_call.1} parent=27 // pred_fallthru
          _
      $region28: #{tpu_custom_call.1} parent=5 // pred_fallthru
        _
      %p1146 = scmp.le.s32.totalorder 2, %s11
      // Predicated region
      $region37: #{tpu_custom_call.1} parent=5 // pred_check
        %p1147 = pneg %p1146
      $region38: #{tpu_custom_call.1} parent=5 // pred_check_branch
        %1149 = sbr.rel (%p1147) target = $region40
      $region39: #{tpu_custom_call.1} parent=5 // pred_region
        %s1150 = ssub.s32 %s11, 2
        // Predicated region
        $region41: #{tpu_custom_call.1} parent=39 // pred_check
          %p1151 = pneg %p108
        $region42: #{tpu_custom_call.1} parent=39 // pred_check_branch
          %1153 = sbr.rel (%p1151) target = $region44
        $region43: #{tpu_custom_call.1} parent=39 // pred_region
          %p1154 = scmp.lt.s32.totalorder %s22, 1
          %s1155 = scalar_select %p1154, %s22, 1
          %p1156 = scmp.lt.s32.totalorder %s23, 0
          %s1157 = scalar_select %p1156, %s23, 0
          %s1158 = sadd.s32 %s1157, %s1155
          %s1159 = scalar_lea.vmem %s2, %s1158
        $region44: #{tpu_custom_call.1} parent=39 // pred_fallthru
          _
      $region40: #{tpu_custom_call.1} parent=5 // pred_fallthru
        _
    $region6: #{tpu_custom_call.1} parent=1 // loop_footer
      %s15 = sadd.s32 1, %s11
    $region7: #{tpu_custom_call.1} parent=1 // loop_footer_branch
      %10 = sbr.rel target = $region3
    $region8: #{tpu_custom_call.1} parent=1 // loop_exit
      _
    %1160 = vsyncpa [#allocation3], 1
    %s1161 = scalar_lea.sflag [#allocation3], 1
    %1162 = vsyncpa %s1161, 1

</llo_original>
